<compile_context>
chip_gen: v6e
topology: v6e:2x2x1
jax: 0.10.0
libtpu: 0.0.40
codegen_flags: <defaults>
</compile_context>

<pallas_src>
import jax
import jax.numpy as jnp
from jax.experimental import pallas as pl
from jax.experimental.pallas import tpu as pltpu


def _make_lstm_fc_kernel(T, B, I, H, L):
    """Builds the kernel with all shapes baked in (fully static unrolling)."""
    H4 = 4 * H

    def kernel(*refs):
        # Refs (w_ih_r only present when L > 1):
        #   x_ref   : (B*T, I)  f32  batch-major rows (row b*T + t)
        #   wih0_ref: (I, 4H)   f32  layer-0 input->gate weights (order i|f|g|o)
        #   wihr_ref: (L-1, H, 4H) bf16  input->gate weights, layers 1..L-1
        #   whh_ref : (L, H, 4H)   bf16  hidden->gate weights
        #   b_ref   : (L, 1, 4H)   f32   b_ih + b_hh
        #   wfc_ref : (1, H) f32, bfc_ref: (1, 1) f32
        #   out_ref : (B, 1) f32
        if L > 1:
            (x_ref, wih0_ref, wihr_ref, whh_ref, b_ref, wfc_ref, bfc_ref,
             out_ref) = refs
        else:
            (x_ref, wih0_ref, whh_ref, b_ref, wfc_ref, bfc_ref,
             out_ref) = refs
            wihr_ref = None

        # Layer-0 hoisted input projection: one MXU matmul over the whole
        # sequence, bias folded in.  f32 operands (done once, off the per-step
        # critical path).
        gin0 = (jnp.dot(x_ref[...], wih0_ref[...],
                        preferred_element_type=jnp.float32)
                + b_ref[0])                                    # (B*T, 4H)
        # Batch-major view; [:, t, :] is a sublane pick on a (B, T, 128) value
        # and only depends on gin0, so all T slices can issue early.
        gin0 = gin0.reshape(B, T, H4)
        gin_t = [gin0[:, t, :] for t in range(T)]              # T x (B, 4H)

        # Loop-invariant weights loaded once (static indexing, bf16 for MXU).
        whh = [whh_ref[l] for l in range(L)]                   # (H, 4H) bf16
        wih_nxt = ([wihr_ref[l] for l in range(L - 1)] if L > 1 else [])
        bias = [b_ref[l] for l in range(L)]                    # (1, 4H) f32

        h = [jnp.zeros((B, H), jnp.float32) for _ in range(L)]
        c = [jnp.zeros((B, H), jnp.float32) for _ in range(L)]

        # Layer wavefront: at timestep t, layer l consumes layer l-1's output
        # for the SAME timestep (just produced) and its own t-1 state.
        # Critical path = T + L - 1 dependent MXU->EUP->VPU steps.
        for t in range(T):                                     # static unroll
            for l in range(L):                                 # static unroll
                rec = jnp.dot(h[l].astype(jnp.bfloat16), whh[l],
                              preferred_element_type=jnp.float32)
                if l == 0:
                    g = gin_t[t] + rec
                else:
                    # Per-step fused input projection from the layer below
                    # (independent of this layer's recurrence -> parallel MXU).
                    g = (jnp.dot(h[l - 1].astype(jnp.bfloat16), wih_nxt[l - 1],
                                 preferred_element_type=jnp.float32)
                         + rec + bias[l])
                # Full-vreg (B, 128) EUP pushes; gates are cheap lane slices.
                sig = jax.nn.sigmoid(g)
                th = jnp.tanh(g)
                i_g = sig[:, 0:H]
                f_g = sig[:, H:2 * H]
                g_g = th[:, 2 * H:3 * H]
                o_g = sig[:, 3 * H:H4]
                c[l] = f_g * c[l] + i_g * g_g
                h[l] = o_g * jnp.tanh(c[l])

        # fc(out[:, -1, :]): 1-wide output -> VPU multiply + lane reduction
        # (avoids a wasted 1-column MXU push/pop at the kernel tail).
        out_ref[...] = (jnp.sum(h[L - 1] * wfc_ref[...], axis=-1, keepdims=True)
                        + bfc_ref[...])

    return kernel


@jax.jit
def temperature_lstm_forward(x, params):
    """x: (B, T, input_size) float32 -> (B, 1) float32 (same as torch module)."""
    B, T, I = x.shape
    whh = params["w_hh"]
    L, H, H4 = whh.shape
    assert H4 == 4 * H and L >= 1

    # Batch-major flattened rows: a free, contiguous reshape (no transpose, no
    # extra HBM round-trip); everything below fuses into one jitted executable.
    x_rows = x.astype(jnp.float32).reshape(B * T, I)

    # bf16 operands for the per-step MXU dots (f32 accumulate in-kernel).
    whh_b = whh.astype(jnp.bfloat16)
    args = [x_rows, params["w_ih0"].astype(jnp.float32)]
    if L > 1:
        args.append(params["w_ih_r"].astype(jnp.bfloat16))
    args += [whh_b, params["b"], params["w_fc"], params["b_fc"]]

    kernel = _make_lstm_fc_kernel(T, B, I, H, L)
    vmem = pl.BlockSpec(memory_space=pltpu.MemorySpace.VMEM)
    return pl.pallas_call(
        kernel,
        out_shape=jax.ShapeDtypeStruct((B, 1), jnp.float32),
        in_specs=[vmem] * len(args),
        out_specs=vmem,
    )(*args)


def init_params(key, input_size, hidden_size, num_layers):
    """torch.nn.LSTM / Linear default init U(-1/sqrt(H), 1/sqrt(H)).

    Weights are stored pre-transposed for right-multiplication; PyTorch gate
    order i|f|g|o is preserved along the 4H axis.
    """
    H = hidden_size
    k = 1.0 / float(H) ** 0.5
    keys = jax.random.split(key, 4 * num_layers + 2)

    wih_list, whh_list, b_list = [], [], []
    for l in range(num_layers):
        in_dim = input_size if l == 0 else H
        kw = keys[4 * l:4 * l + 4]
        w_ih = jax.random.uniform(kw[0], (in_dim, 4 * H), jnp.float32, -k, k)
        w_hh = jax.random.uniform(kw[1], (H, 4 * H), jnp.float32, -k, k)
        b_ih = jax.random.uniform(kw[2], (4 * H,), jnp.float32, -k, k)
        b_hh = jax.random.uniform(kw[3], (4 * H,), jnp.float32, -k, k)
        wih_list.append(w_ih)
        whh_list.append(w_hh)
        b_list.append((b_ih + b_hh)[None, :])

    w_fc = jax.random.uniform(keys[-2], (1, H), jnp.float32, -k, k)
    b_fc = jax.random.uniform(keys[-1], (1, 1), jnp.float32, -k, k)
    params = {
        "w_ih0": wih_list[0],            # (input_size, 4H)
        "w_hh": jnp.stack(whh_list),     # (L, H, 4H)
        "b": jnp.stack(b_list),          # (L, 1, 4H)
        "w_fc": w_fc,                    # (1, H)
        "b_fc": b_fc,                    # (1, 1)
    }
    if num_layers > 1:
        params["w_ih_r"] = jnp.stack(wih_list[1:])   # (L-1, H, 4H)
    return params


def reference_forward(x, params):
    """Pure-JAX f32 replica of torch.nn.LSTM (batch_first) + Linear."""
    B, T, _ = x.shape
    whh_all, b_all = params["w_hh"], params["b"]
    L, H, _ = whh_all.shape
    inp = x.astype(jnp.float32)
    h = None
    for l in range(L):
        w_ih = params["w_ih0"] if l == 0 else params["w_ih_r"][l - 1]
        h = jnp.zeros((B, H), jnp.float32)
        c = jnp.zeros((B, H), jnp.float32)
        outs = []
        for t in range(T):
            gates = inp[:, t, :] @ w_ih + h @ whh_all[l] + b_all[l]
            i_g = jax.nn.sigmoid(gates[:, :H])
            f_g = jax.nn.sigmoid(gates[:, H:2 * H])
            g_g = jnp.tanh(gates[:, 2 * H:3 * H])
            o_g = jax.nn.sigmoid(gates[:, 3 * H:])
            c = f_g * c + i_g * g_g
            h = o_g * jnp.tanh(c)
            outs.append(h)
        inp = jnp.stack(outs, axis=1)
    return h @ params["w_fc"].T + params["b_fc"]


if __name__ == "__main__":
    INPUT_SIZE = 4
    HIDDEN_SIZE = 32
    NUM_LAYERS = 2
    B, T = 2, 8

    key = jax.random.PRNGKey(0)
    k_x, k_p = jax.random.split(key)
    x = jax.random.normal(k_x, (B, T, INPUT_SIZE), jnp.float32)
    params = init_params(k_p, INPUT_SIZE, HIDDEN_SIZE, NUM_LAYERS)

    out = jax.block_until_ready(temperature_lstm_forward(x, params))
    ref = jax.block_until_ready(reference_forward(x, params))

    assert out.shape == (B, 1)
    # Tolerance re-validated for bf16 MXU operands on the recurrent dots
    # (per perf review): observed error is ~1e-3, bound comfortably by 5e-2.
    assert jnp.allclose(out, ref, atol=5e-2, rtol=5e-2), (out, ref)
    print("KERNEL_OK")
</pallas_src>

<mosaic_0001>
module attributes {stable_mosaic.version = 11 : i64} {
  func.func @kernel(%arg0: memref<16x4xf32, #tpu.memory_space<vmem>>, %arg1: memref<4x128xf32, #tpu.memory_space<vmem>>, %arg2: memref<1x32x128xbf16, #tpu.memory_space<vmem>>, %arg3: memref<2x32x128xbf16, #tpu.memory_space<vmem>>, %arg4: memref<2x1x128xf32, #tpu.memory_space<vmem>>, %arg5: memref<1x32xf32, #tpu.memory_space<vmem>>, %arg6: memref<1x1xf32, #tpu.memory_space<vmem>>, %arg7: memref<2x1xf32, #tpu.memory_space<vmem>>) attributes {dimension_semantics = [], scalar_prefetch = 0 : i64, scratch_operands = 0 : i64, tpu.core_type = #tpu.core_type<tc>} {
    %c0 = arith.constant 0 : index
    %c0_0 = arith.constant 0 : index
    %0 = vector.load %arg0[%c0, %c0_0] : memref<16x4xf32, #tpu.memory_space<vmem>>, vector<16x4xf32>
    %c0_1 = arith.constant 0 : index
    %c0_2 = arith.constant 0 : index
    %1 = vector.load %arg1[%c0_1, %c0_2] : memref<4x128xf32, #tpu.memory_space<vmem>>, vector<4x128xf32>
    %cst = arith.constant dense<0.000000e+00> : vector<16x128xf32>
    %2 = tpu.matmul %0, %1, %cst {dimension_numbers = #tpu.dot_dimension_numbers<[1], [0], [0], [1], [0, 0, 1, 1], [], []>} : vector<16x4xf32>, vector<4x128xf32>, vector<16x128xf32> -> vector<16x128xf32>
    %c0_3 = arith.constant 0 : index
    %c0_4 = arith.constant 0 : index
    %c0_5 = arith.constant 0 : index
    %3 = vector.load %arg4[%c0_3, %c0_4, %c0_5] : memref<2x1x128xf32, #tpu.memory_space<vmem>>, vector<1x1x128xf32>
    %4 = vector.shape_cast %3 : vector<1x1x128xf32> to vector<1x128xf32>
    %5 = vector.broadcast %4 : vector<1x128xf32> to vector<16x128xf32>
    %6 = arith.addf %2, %5 : vector<16x128xf32>
    %7 = vector.shape_cast %6 : vector<16x128xf32> to vector<2x8x128xf32>
    %8 = vector.extract_strided_slice %7 {offsets = [0, 0, 0], sizes = [2, 1, 128], strides = [1, 1, 1]} : vector<2x8x128xf32> to vector<2x1x128xf32>
    %9 = vector.shape_cast %8 : vector<2x1x128xf32> to vector<2x128xf32>
    %10 = vector.extract_strided_slice %7 {offsets = [0, 1, 0], sizes = [2, 1, 128], strides = [1, 1, 1]} : vector<2x8x128xf32> to vector<2x1x128xf32>
    %11 = vector.shape_cast %10 : vector<2x1x128xf32> to vector<2x128xf32>
    %12 = vector.extract_strided_slice %7 {offsets = [0, 2, 0], sizes = [2, 1, 128], strides = [1, 1, 1]} : vector<2x8x128xf32> to vector<2x1x128xf32>
    %13 = vector.shape_cast %12 : vector<2x1x128xf32> to vector<2x128xf32>
    %14 = vector.extract_strided_slice %7 {offsets = [0, 3, 0], sizes = [2, 1, 128], strides = [1, 1, 1]} : vector<2x8x128xf32> to vector<2x1x128xf32>
    %15 = vector.shape_cast %14 : vector<2x1x128xf32> to vector<2x128xf32>
    %16 = vector.extract_strided_slice %7 {offsets = [0, 4, 0], sizes = [2, 1, 128], strides = [1, 1, 1]} : vector<2x8x128xf32> to vector<2x1x128xf32>
    %17 = vector.shape_cast %16 : vector<2x1x128xf32> to vector<2x128xf32>
    %18 = vector.extract_strided_slice %7 {offsets = [0, 5, 0], sizes = [2, 1, 128], strides = [1, 1, 1]} : vector<2x8x128xf32> to vector<2x1x128xf32>
    %19 = vector.shape_cast %18 : vector<2x1x128xf32> to vector<2x128xf32>
    %20 = vector.extract_strided_slice %7 {offsets = [0, 6, 0], sizes = [2, 1, 128], strides = [1, 1, 1]} : vector<2x8x128xf32> to vector<2x1x128xf32>
    %21 = vector.shape_cast %20 : vector<2x1x128xf32> to vector<2x128xf32>
    %22 = vector.extract_strided_slice %7 {offsets = [0, 7, 0], sizes = [2, 1, 128], strides = [1, 1, 1]} : vector<2x8x128xf32> to vector<2x1x128xf32>
    %23 = vector.shape_cast %22 : vector<2x1x128xf32> to vector<2x128xf32>
    %c0_6 = arith.constant 0 : index
    %c0_7 = arith.constant 0 : index
    %c0_8 = arith.constant 0 : index
    %24 = vector.load %arg3[%c0_6, %c0_7, %c0_8] : memref<2x32x128xbf16, #tpu.memory_space<vmem>>, vector<1x32x128xbf16>
    %25 = vector.shape_cast %24 : vector<1x32x128xbf16> to vector<32x128xbf16>
    %c1 = arith.constant 1 : index
    %c0_9 = arith.constant 0 : index
    %c0_10 = arith.constant 0 : index
    %26 = vector.load %arg3[%c1, %c0_9, %c0_10] : memref<2x32x128xbf16, #tpu.memory_space<vmem>>, vector<1x32x128xbf16>
    %27 = vector.shape_cast %26 : vector<1x32x128xbf16> to vector<32x128xbf16>
    %c0_11 = arith.constant 0 : index
    %c0_12 = arith.constant 0 : index
    %c0_13 = arith.constant 0 : index
    %28 = vector.load %arg2[%c0_11, %c0_12, %c0_13] : memref<1x32x128xbf16, #tpu.memory_space<vmem>>, vector<1x32x128xbf16>
    %29 = vector.shape_cast %28 : vector<1x32x128xbf16> to vector<32x128xbf16>
    %c1_14 = arith.constant 1 : index
    %c0_15 = arith.constant 0 : index
    %c0_16 = arith.constant 0 : index
    %30 = vector.load %arg4[%c1_14, %c0_15, %c0_16] : memref<2x1x128xf32, #tpu.memory_space<vmem>>, vector<1x1x128xf32>
    %31 = vector.shape_cast %30 : vector<1x1x128xf32> to vector<1x128xf32>
    %cst_17 = arith.constant 0.000000e+00 : f32
    %32 = vector.broadcast %cst_17 : f32 to vector<2x32xf32>
    %cst_18 = arith.constant 0.000000e+00 : f32
    %33 = vector.broadcast %cst_18 : f32 to vector<2x32xf32>
    %cst_19 = arith.constant 0.000000e+00 : f32
    %34 = vector.broadcast %cst_19 : f32 to vector<2x32xf32>
    %cst_20 = arith.constant 0.000000e+00 : f32
    %35 = vector.broadcast %cst_20 : f32 to vector<2x32xf32>
    %36 = arith.truncf %32 : vector<2x32xf32> to vector<2x32xbf16>
    %cst_21 = arith.constant dense<0.000000e+00> : vector<2x128xf32>
    %37 = tpu.matmul %36, %25, %cst_21 {dimension_numbers = #tpu.dot_dimension_numbers<[1], [0], [0], [1], [0, 0, 1, 1], [], []>} : vector<2x32xbf16>, vector<32x128xbf16>, vector<2x128xf32> -> vector<2x128xf32>
    %38 = arith.addf %9, %37 : vector<2x128xf32>
    %39 = arith.negf %38 : vector<2x128xf32>
    %40 = math.exp %39 : vector<2x128xf32>
    %cst_22 = arith.constant 1.000000e+00 : f32
    %41 = vector.broadcast %cst_22 : f32 to vector<2x128xf32>
    %42 = arith.addf %41, %40 : vector<2x128xf32>
    %43 = arith.divf %41, %42 : vector<2x128xf32>
    %44 = math.tanh %38 : vector<2x128xf32>
    %45 = vector.extract_strided_slice %43 {offsets = [0, 0], sizes = [2, 32], strides = [1, 1]} : vector<2x128xf32> to vector<2x32xf32>
    %46 = vector.extract_strided_slice %43 {offsets = [0, 32], sizes = [2, 32], strides = [1, 1]} : vector<2x128xf32> to vector<2x32xf32>
    %47 = vector.extract_strided_slice %44 {offsets = [0, 64], sizes = [2, 32], strides = [1, 1]} : vector<2x128xf32> to vector<2x32xf32>
    %48 = vector.extract_strided_slice %43 {offsets = [0, 96], sizes = [2, 32], strides = [1, 1]} : vector<2x128xf32> to vector<2x32xf32>
    %49 = arith.mulf %46, %34 : vector<2x32xf32>
    %50 = arith.mulf %45, %47 : vector<2x32xf32>
    %51 = arith.addf %49, %50 : vector<2x32xf32>
    %52 = math.tanh %51 : vector<2x32xf32>
    %53 = arith.mulf %48, %52 : vector<2x32xf32>
    %54 = arith.truncf %33 : vector<2x32xf32> to vector<2x32xbf16>
    %cst_23 = arith.constant dense<0.000000e+00> : vector<2x128xf32>
    %55 = tpu.matmul %54, %27, %cst_23 {dimension_numbers = #tpu.dot_dimension_numbers<[1], [0], [0], [1], [0, 0, 1, 1], [], []>} : vector<2x32xbf16>, vector<32x128xbf16>, vector<2x128xf32> -> vector<2x128xf32>
    %56 = arith.truncf %53 : vector<2x32xf32> to vector<2x32xbf16>
    %cst_24 = arith.constant dense<0.000000e+00> : vector<2x128xf32>
    %57 = tpu.matmul %56, %29, %cst_24 {dimension_numbers = #tpu.dot_dimension_numbers<[1], [0], [0], [1], [0, 0, 1, 1], [], []>} : vector<2x32xbf16>, vector<32x128xbf16>, vector<2x128xf32> -> vector<2x128xf32>
    %58 = arith.addf %57, %55 : vector<2x128xf32>
    %59 = vector.broadcast %31 : vector<1x128xf32> to vector<2x128xf32>
    %60 = arith.addf %58, %59 : vector<2x128xf32>
    %61 = arith.negf %60 : vector<2x128xf32>
    %62 = math.exp %61 : vector<2x128xf32>
    %cst_25 = arith.constant 1.000000e+00 : f32
    %63 = vector.broadcast %cst_25 : f32 to vector<2x128xf32>
    %64 = arith.addf %63, %62 : vector<2x128xf32>
    %65 = arith.divf %63, %64 : vector<2x128xf32>
    %66 = math.tanh %60 : vector<2x128xf32>
    %67 = vector.extract_strided_slice %65 {offsets = [0, 0], sizes = [2, 32], strides = [1, 1]} : vector<2x128xf32> to vector<2x32xf32>
    %68 = vector.extract_strided_slice %65 {offsets = [0, 32], sizes = [2, 32], strides = [1, 1]} : vector<2x128xf32> to vector<2x32xf32>
    %69 = vector.extract_strided_slice %66 {offsets = [0, 64], sizes = [2, 32], strides = [1, 1]} : vector<2x128xf32> to vector<2x32xf32>
    %70 = vector.extract_strided_slice %65 {offsets = [0, 96], sizes = [2, 32], strides = [1, 1]} : vector<2x128xf32> to vector<2x32xf32>
    %71 = arith.mulf %68, %35 : vector<2x32xf32>
    %72 = arith.mulf %67, %69 : vector<2x32xf32>
    %73 = arith.addf %71, %72 : vector<2x32xf32>
    %74 = math.tanh %73 : vector<2x32xf32>
    %75 = arith.mulf %70, %74 : vector<2x32xf32>
    %76 = arith.truncf %53 : vector<2x32xf32> to vector<2x32xbf16>
    %cst_26 = arith.constant dense<0.000000e+00> : vector<2x128xf32>
    %77 = tpu.matmul %76, %25, %cst_26 {dimension_numbers = #tpu.dot_dimension_numbers<[1], [0], [0], [1], [0, 0, 1, 1], [], []>} : vector<2x32xbf16>, vector<32x128xbf16>, vector<2x128xf32> -> vector<2x128xf32>
    %78 = arith.addf %11, %77 : vector<2x128xf32>
    %79 = arith.negf %78 : vector<2x128xf32>
    %80 = math.exp %79 : vector<2x128xf32>
    %cst_27 = arith.constant 1.000000e+00 : f32
    %81 = vector.broadcast %cst_27 : f32 to vector<2x128xf32>
    %82 = arith.addf %81, %80 : vector<2x128xf32>
    %83 = arith.divf %81, %82 : vector<2x128xf32>
    %84 = math.tanh %78 : vector<2x128xf32>
    %85 = vector.extract_strided_slice %83 {offsets = [0, 0], sizes = [2, 32], strides = [1, 1]} : vector<2x128xf32> to vector<2x32xf32>
    %86 = vector.extract_strided_slice %83 {offsets = [0, 32], sizes = [2, 32], strides = [1, 1]} : vector<2x128xf32> to vector<2x32xf32>
    %87 = vector.extract_strided_slice %84 {offsets = [0, 64], sizes = [2, 32], strides = [1, 1]} : vector<2x128xf32> to vector<2x32xf32>
    %88 = vector.extract_strided_slice %83 {offsets = [0, 96], sizes = [2, 32], strides = [1, 1]} : vector<2x128xf32> to vector<2x32xf32>
    %89 = arith.mulf %86, %51 : vector<2x32xf32>
    %90 = arith.mulf %85, %87 : vector<2x32xf32>
    %91 = arith.addf %89, %90 : vector<2x32xf32>
    %92 = math.tanh %91 : vector<2x32xf32>
    %93 = arith.mulf %88, %92 : vector<2x32xf32>
    %94 = arith.truncf %75 : vector<2x32xf32> to vector<2x32xbf16>
    %cst_28 = arith.constant dense<0.000000e+00> : vector<2x128xf32>
    %95 = tpu.matmul %94, %27, %cst_28 {dimension_numbers = #tpu.dot_dimension_numbers<[1], [0], [0], [1], [0, 0, 1, 1], [], []>} : vector<2x32xbf16>, vector<32x128xbf16>, vector<2x128xf32> -> vector<2x128xf32>
    %96 = arith.truncf %93 : vector<2x32xf32> to vector<2x32xbf16>
    %cst_29 = arith.constant dense<0.000000e+00> : vector<2x128xf32>
    %97 = tpu.matmul %96, %29, %cst_29 {dimension_numbers = #tpu.dot_dimension_numbers<[1], [0], [0], [1], [0, 0, 1, 1], [], []>} : vector<2x32xbf16>, vector<32x128xbf16>, vector<2x128xf32> -> vector<2x128xf32>
    %98 = arith.addf %97, %95 : vector<2x128xf32>
    %99 = vector.broadcast %31 : vector<1x128xf32> to vector<2x128xf32>
    %100 = arith.addf %98, %99 : vector<2x128xf32>
    %101 = arith.negf %100 : vector<2x128xf32>
    %102 = math.exp %101 : vector<2x128xf32>
    %cst_30 = arith.constant 1.000000e+00 : f32
    %103 = vector.broadcast %cst_30 : f32 to vector<2x128xf32>
    %104 = arith.addf %103, %102 : vector<2x128xf32>
    %105 = arith.divf %103, %104 : vector<2x128xf32>
    %106 = math.tanh %100 : vector<2x128xf32>
    %107 = vector.extract_strided_slice %105 {offsets = [0, 0], sizes = [2, 32], strides = [1, 1]} : vector<2x128xf32> to vector<2x32xf32>
    %108 = vector.extract_strided_slice %105 {offsets = [0, 32], sizes = [2, 32], strides = [1, 1]} : vector<2x128xf32> to vector<2x32xf32>
    %109 = vector.extract_strided_slice %106 {offsets = [0, 64], sizes = [2, 32], strides = [1, 1]} : vector<2x128xf32> to vector<2x32xf32>
    %110 = vector.extract_strided_slice %105 {offsets = [0, 96], sizes = [2, 32], strides = [1, 1]} : vector<2x128xf32> to vector<2x32xf32>
    %111 = arith.mulf %108, %73 : vector<2x32xf32>
    %112 = arith.mulf %107, %109 : vector<2x32xf32>
    %113 = arith.addf %111, %112 : vector<2x32xf32>
    %114 = math.tanh %113 : vector<2x32xf32>
    %115 = arith.mulf %110, %114 : vector<2x32xf32>
    %116 = arith.truncf %93 : vector<2x32xf32> to vector<2x32xbf16>
    %cst_31 = arith.constant dense<0.000000e+00> : vector<2x128xf32>
    %117 = tpu.matmul %116, %25, %cst_31 {dimension_numbers = #tpu.dot_dimension_numbers<[1], [0], [0], [1], [0, 0, 1, 1], [], []>} : vector<2x32xbf16>, vector<32x128xbf16>, vector<2x128xf32> -> vector<2x128xf32>
    %118 = arith.addf %13, %117 : vector<2x128xf32>
    %119 = arith.negf %118 : vector<2x128xf32>
    %120 = math.exp %119 : vector<2x128xf32>
    %cst_32 = arith.constant 1.000000e+00 : f32
    %121 = vector.broadcast %cst_32 : f32 to vector<2x128xf32>
    %122 = arith.addf %121, %120 : vector<2x128xf32>
    %123 = arith.divf %121, %122 : vector<2x128xf32>
    %124 = math.tanh %118 : vector<2x128xf32>
    %125 = vector.extract_strided_slice %123 {offsets = [0, 0], sizes = [2, 32], strides = [1, 1]} : vector<2x128xf32> to vector<2x32xf32>
    %126 = vector.extract_strided_slice %123 {offsets = [0, 32], sizes = [2, 32], strides = [1, 1]} : vector<2x128xf32> to vector<2x32xf32>
    %127 = vector.extract_strided_slice %124 {offsets = [0, 64], sizes = [2, 32], strides = [1, 1]} : vector<2x128xf32> to vector<2x32xf32>
    %128 = vector.extract_strided_slice %123 {offsets = [0, 96], sizes = [2, 32], strides = [1, 1]} : vector<2x128xf32> to vector<2x32xf32>
    %129 = arith.mulf %126, %91 : vector<2x32xf32>
    %130 = arith.mulf %125, %127 : vector<2x32xf32>
    %131 = arith.addf %129, %130 : vector<2x32xf32>
    %132 = math.tanh %131 : vector<2x32xf32>
    %133 = arith.mulf %128, %132 : vector<2x32xf32>
    %134 = arith.truncf %115 : vector<2x32xf32> to vector<2x32xbf16>
    %cst_33 = arith.constant dense<0.000000e+00> : vector<2x128xf32>
    %135 = tpu.matmul %134, %27, %cst_33 {dimension_numbers = #tpu.dot_dimension_numbers<[1], [0], [0], [1], [0, 0, 1, 1], [], []>} : vector<2x32xbf16>, vector<32x128xbf16>, vector<2x128xf32> -> vector<2x128xf32>
    %136 = arith.truncf %133 : vector<2x32xf32> to vector<2x32xbf16>
    %cst_34 = arith.constant dense<0.000000e+00> : vector<2x128xf32>
    %137 = tpu.matmul %136, %29, %cst_34 {dimension_numbers = #tpu.dot_dimension_numbers<[1], [0], [0], [1], [0, 0, 1, 1], [], []>} : vector<2x32xbf16>, vector<32x128xbf16>, vector<2x128xf32> -> vector<2x128xf32>
    %138 = arith.addf %137, %135 : vector<2x128xf32>
    %139 = vector.broadcast %31 : vector<1x128xf32> to vector<2x128xf32>
    %140 = arith.addf %138, %139 : vector<2x128xf32>
    %141 = arith.negf %140 : vector<2x128xf32>
    %142 = math.exp %141 : vector<2x128xf32>
    %cst_35 = arith.constant 1.000000e+00 : f32
    %143 = vector.broadcast %cst_35 : f32 to vector<2x128xf32>
    %144 = arith.addf %143, %142 : vector<2x128xf32>
    %145 = arith.divf %143, %144 : vector<2x128xf32>
    %146 = math.tanh %140 : vector<2x128xf32>
    %147 = vector.extract_strided_slice %145 {offsets = [0, 0], sizes = [2, 32], strides = [1, 1]} : vector<2x128xf32> to vector<2x32xf32>
    %148 = vector.extract_strided_slice %145 {offsets = [0, 32], sizes = [2, 32], strides = [1, 1]} : vector<2x128xf32> to vector<2x32xf32>
    %149 = vector.extract_strided_slice %146 {offsets = [0, 64], sizes = [2, 32], strides = [1, 1]} : vector<2x128xf32> to vector<2x32xf32>
    %150 = vector.extract_strided_slice %145 {offsets = [0, 96], sizes = [2, 32], strides = [1, 1]} : vector<2x128xf32> to vector<2x32xf32>
    %151 = arith.mulf %148, %113 : vector<2x32xf32>
    %152 = arith.mulf %147, %149 : vector<2x32xf32>
    %153 = arith.addf %151, %152 : vector<2x32xf32>
    %154 = math.tanh %153 : vector<2x32xf32>
    %155 = arith.mulf %150, %154 : vector<2x32xf32>
    %156 = arith.truncf %133 : vector<2x32xf32> to vector<2x32xbf16>
    %cst_36 = arith.constant dense<0.000000e+00> : vector<2x128xf32>
    %157 = tpu.matmul %156, %25, %cst_36 {dimension_numbers = #tpu.dot_dimension_numbers<[1], [0], [0], [1], [0, 0, 1, 1], [], []>} : vector<2x32xbf16>, vector<32x128xbf16>, vector<2x128xf32> -> vector<2x128xf32>
    %158 = arith.addf %15, %157 : vector<2x128xf32>
    %159 = arith.negf %158 : vector<2x128xf32>
    %160 = math.exp %159 : vector<2x128xf32>
    %cst_37 = arith.constant 1.000000e+00 : f32
    %161 = vector.broadcast %cst_37 : f32 to vector<2x128xf32>
    %162 = arith.addf %161, %160 : vector<2x128xf32>
    %163 = arith.divf %161, %162 : vector<2x128xf32>
    %164 = math.tanh %158 : vector<2x128xf32>
    %165 = vector.extract_strided_slice %163 {offsets = [0, 0], sizes = [2, 32], strides = [1, 1]} : vector<2x128xf32> to vector<2x32xf32>
    %166 = vector.extract_strided_slice %163 {offsets = [0, 32], sizes = [2, 32], strides = [1, 1]} : vector<2x128xf32> to vector<2x32xf32>
    %167 = vector.extract_strided_slice %164 {offsets = [0, 64], sizes = [2, 32], strides = [1, 1]} : vector<2x128xf32> to vector<2x32xf32>
    %168 = vector.extract_strided_slice %163 {offsets = [0, 96], sizes = [2, 32], strides = [1, 1]} : vector<2x128xf32> to vector<2x32xf32>
    %169 = arith.mulf %166, %131 : vector<2x32xf32>
    %170 = arith.mulf %165, %167 : vector<2x32xf32>
    %171 = arith.addf %169, %170 : vector<2x32xf32>
    %172 = math.tanh %171 : vector<2x32xf32>
    %173 = arith.mulf %168, %172 : vector<2x32xf32>
    %174 = arith.truncf %155 : vector<2x32xf32> to vector<2x32xbf16>
    %cst_38 = arith.constant dense<0.000000e+00> : vector<2x128xf32>
    %175 = tpu.matmul %174, %27, %cst_38 {dimension_numbers = #tpu.dot_dimension_numbers<[1], [0], [0], [1], [0, 0, 1, 1], [], []>} : vector<2x32xbf16>, vector<32x128xbf16>, vector<2x128xf32> -> vector<2x128xf32>
    %176 = arith.truncf %173 : vector<2x32xf32> to vector<2x32xbf16>
    %cst_39 = arith.constant dense<0.000000e+00> : vector<2x128xf32>
    %177 = tpu.matmul %176, %29, %cst_39 {dimension_numbers = #tpu.dot_dimension_numbers<[1], [0], [0], [1], [0, 0, 1, 1], [], []>} : vector<2x32xbf16>, vector<32x128xbf16>, vector<2x128xf32> -> vector<2x128xf32>
    %178 = arith.addf %177, %175 : vector<2x128xf32>
    %179 = vector.broadcast %31 : vector<1x128xf32> to vector<2x128xf32>
    %180 = arith.addf %178, %179 : vector<2x128xf32>
    %181 = arith.negf %180 : vector<2x128xf32>
    %182 = math.exp %181 : vector<2x128xf32>
    %cst_40 = arith.constant 1.000000e+00 : f32
    %183 = vector.broadcast %cst_40 : f32 to vector<2x128xf32>
    %184 = arith.addf %183, %182 : vector<2x128xf32>
    %185 = arith.divf %183, %184 : vector<2x128xf32>
    %186 = math.tanh %180 : vector<2x128xf32>
    %187 = vector.extract_strided_slice %185 {offsets = [0, 0], sizes = [2, 32], strides = [1, 1]} : vector<2x128xf32> to vector<2x32xf32>
    %188 = vector.extract_strided_slice %185 {offsets = [0, 32], sizes = [2, 32], strides = [1, 1]} : vector<2x128xf32> to vector<2x32xf32>
    %189 = vector.extract_strided_slice %186 {offsets = [0, 64], sizes = [2, 32], strides = [1, 1]} : vector<2x128xf32> to vector<2x32xf32>
    %190 = vector.extract_strided_slice %185 {offsets = [0, 96], sizes = [2, 32], strides = [1, 1]} : vector<2x128xf32> to vector<2x32xf32>
    %191 = arith.mulf %188, %153 : vector<2x32xf32>
    %192 = arith.mulf %187, %189 : vector<2x32xf32>
    %193 = arith.addf %191, %192 : vector<2x32xf32>
    %194 = math.tanh %193 : vector<2x32xf32>
    %195 = arith.mulf %190, %194 : vector<2x32xf32>
    %196 = arith.truncf %173 : vector<2x32xf32> to vector<2x32xbf16>
    %cst_41 = arith.constant dense<0.000000e+00> : vector<2x128xf32>
    %197 = tpu.matmul %196, %25, %cst_41 {dimension_numbers = #tpu.dot_dimension_numbers<[1], [0], [0], [1], [0, 0, 1, 1], [], []>} : vector<2x32xbf16>, vector<32x128xbf16>, vector<2x128xf32> -> vector<2x128xf32>
    %198 = arith.addf %17, %197 : vector<2x128xf32>
    %199 = arith.negf %198 : vector<2x128xf32>
    %200 = math.exp %199 : vector<2x128xf32>
    %cst_42 = arith.constant 1.000000e+00 : f32
    %201 = vector.broadcast %cst_42 : f32 to vector<2x128xf32>
    %202 = arith.addf %201, %200 : vector<2x128xf32>
    %203 = arith.divf %201, %202 : vector<2x128xf32>
    %204 = math.tanh %198 : vector<2x128xf32>
    %205 = vector.extract_strided_slice %203 {offsets = [0, 0], sizes = [2, 32], strides = [1, 1]} : vector<2x128xf32> to vector<2x32xf32>
    %206 = vector.extract_strided_slice %203 {offsets = [0, 32], sizes = [2, 32], strides = [1, 1]} : vector<2x128xf32> to vector<2x32xf32>
    %207 = vector.extract_strided_slice %204 {offsets = [0, 64], sizes = [2, 32], strides = [1, 1]} : vector<2x128xf32> to vector<2x32xf32>
    %208 = vector.extract_strided_slice %203 {offsets = [0, 96], sizes = [2, 32], strides = [1, 1]} : vector<2x128xf32> to vector<2x32xf32>
    %209 = arith.mulf %206, %171 : vector<2x32xf32>
    %210 = arith.mulf %205, %207 : vector<2x32xf32>
    %211 = arith.addf %209, %210 : vector<2x32xf32>
    %212 = math.tanh %211 : vector<2x32xf32>
    %213 = arith.mulf %208, %212 : vector<2x32xf32>
    %214 = arith.truncf %195 : vector<2x32xf32> to vector<2x32xbf16>
    %cst_43 = arith.constant dense<0.000000e+00> : vector<2x128xf32>
    %215 = tpu.matmul %214, %27, %cst_43 {dimension_numbers = #tpu.dot_dimension_numbers<[1], [0], [0], [1], [0, 0, 1, 1], [], []>} : vector<2x32xbf16>, vector<32x128xbf16>, vector<2x128xf32> -> vector<2x128xf32>
    %216 = arith.truncf %213 : vector<2x32xf32> to vector<2x32xbf16>
    %cst_44 = arith.constant dense<0.000000e+00> : vector<2x128xf32>
    %217 = tpu.matmul %216, %29, %cst_44 {dimension_numbers = #tpu.dot_dimension_numbers<[1], [0], [0], [1], [0, 0, 1, 1], [], []>} : vector<2x32xbf16>, vector<32x128xbf16>, vector<2x128xf32> -> vector<2x128xf32>
    %218 = arith.addf %217, %215 : vector<2x128xf32>
    %219 = vector.broadcast %31 : vector<1x128xf32> to vector<2x128xf32>
    %220 = arith.addf %218, %219 : vector<2x128xf32>
    %221 = arith.negf %220 : vector<2x128xf32>
    %222 = math.exp %221 : vector<2x128xf32>
    %cst_45 = arith.constant 1.000000e+00 : f32
    %223 = vector.broadcast %cst_45 : f32 to vector<2x128xf32>
    %224 = arith.addf %223, %222 : vector<2x128xf32>
    %225 = arith.divf %223, %224 : vector<2x128xf32>
    %226 = math.tanh %220 : vector<2x128xf32>
    %227 = vector.extract_strided_slice %225 {offsets = [0, 0], sizes = [2, 32], strides = [1, 1]} : vector<2x128xf32> to vector<2x32xf32>
    %228 = vector.extract_strided_slice %225 {offsets = [0, 32], sizes = [2, 32], strides = [1, 1]} : vector<2x128xf32> to vector<2x32xf32>
    %229 = vector.extract_strided_slice %226 {offsets = [0, 64], sizes = [2, 32], strides = [1, 1]} : vector<2x128xf32> to vector<2x32xf32>
    %230 = vector.extract_strided_slice %225 {offsets = [0, 96], sizes = [2, 32], strides = [1, 1]} : vector<2x128xf32> to vector<2x32xf32>
    %231 = arith.mulf %228, %193 : vector<2x32xf32>
    %232 = arith.mulf %227, %229 : vector<2x32xf32>
    %233 = arith.addf %231, %232 : vector<2x32xf32>
    %234 = math.tanh %233 : vector<2x32xf32>
    %235 = arith.mulf %230, %234 : vector<2x32xf32>
    %236 = arith.truncf %213 : vector<2x32xf32> to vector<2x32xbf16>
    %cst_46 = arith.constant dense<0.000000e+00> : vector<2x128xf32>
    %237 = tpu.matmul %236, %25, %cst_46 {dimension_numbers = #tpu.dot_dimension_numbers<[1], [0], [0], [1], [0, 0, 1, 1], [], []>} : vector<2x32xbf16>, vector<32x128xbf16>, vector<2x128xf32> -> vector<2x128xf32>
    %238 = arith.addf %19, %237 : vector<2x128xf32>
    %239 = arith.negf %238 : vector<2x128xf32>
    %240 = math.exp %239 : vector<2x128xf32>
    %cst_47 = arith.constant 1.000000e+00 : f32
    %241 = vector.broadcast %cst_47 : f32 to vector<2x128xf32>
    %242 = arith.addf %241, %240 : vector<2x128xf32>
    %243 = arith.divf %241, %242 : vector<2x128xf32>
    %244 = math.tanh %238 : vector<2x128xf32>
    %245 = vector.extract_strided_slice %243 {offsets = [0, 0], sizes = [2, 32], strides = [1, 1]} : vector<2x128xf32> to vector<2x32xf32>
    %246 = vector.extract_strided_slice %243 {offsets = [0, 32], sizes = [2, 32], strides = [1, 1]} : vector<2x128xf32> to vector<2x32xf32>
    %247 = vector.extract_strided_slice %244 {offsets = [0, 64], sizes = [2, 32], strides = [1, 1]} : vector<2x128xf32> to vector<2x32xf32>
    %248 = vector.extract_strided_slice %243 {offsets = [0, 96], sizes = [2, 32], strides = [1, 1]} : vector<2x128xf32> to vector<2x32xf32>
    %249 = arith.mulf %246, %211 : vector<2x32xf32>
    %250 = arith.mulf %245, %247 : vector<2x32xf32>
    %251 = arith.addf %249, %250 : vector<2x32xf32>
    %252 = math.tanh %251 : vector<2x32xf32>
    %253 = arith.mulf %248, %252 : vector<2x32xf32>
    %254 = arith.truncf %235 : vector<2x32xf32> to vector<2x32xbf16>
    %cst_48 = arith.constant dense<0.000000e+00> : vector<2x128xf32>
    %255 = tpu.matmul %254, %27, %cst_48 {dimension_numbers = #tpu.dot_dimension_numbers<[1], [0], [0], [1], [0, 0, 1, 1], [], []>} : vector<2x32xbf16>, vector<32x128xbf16>, vector<2x128xf32> -> vector<2x128xf32>
    %256 = arith.truncf %253 : vector<2x32xf32> to vector<2x32xbf16>
    %cst_49 = arith.constant dense<0.000000e+00> : vector<2x128xf32>
    %257 = tpu.matmul %256, %29, %cst_49 {dimension_numbers = #tpu.dot_dimension_numbers<[1], [0], [0], [1], [0, 0, 1, 1], [], []>} : vector<2x32xbf16>, vector<32x128xbf16>, vector<2x128xf32> -> vector<2x128xf32>
    %258 = arith.addf %257, %255 : vector<2x128xf32>
    %259 = vector.broadcast %31 : vector<1x128xf32> to vector<2x128xf32>
    %260 = arith.addf %258, %259 : vector<2x128xf32>
    %261 = arith.negf %260 : vector<2x128xf32>
    %262 = math.exp %261 : vector<2x128xf32>
    %cst_50 = arith.constant 1.000000e+00 : f32
    %263 = vector.broadcast %cst_50 : f32 to vector<2x128xf32>
    %264 = arith.addf %263, %262 : vector<2x128xf32>
    %265 = arith.divf %263, %264 : vector<2x128xf32>
    %266 = math.tanh %260 : vector<2x128xf32>
    %267 = vector.extract_strided_slice %265 {offsets = [0, 0], sizes = [2, 32], strides = [1, 1]} : vector<2x128xf32> to vector<2x32xf32>
    %268 = vector.extract_strided_slice %265 {offsets = [0, 32], sizes = [2, 32], strides = [1, 1]} : vector<2x128xf32> to vector<2x32xf32>
    %269 = vector.extract_strided_slice %266 {offsets = [0, 64], sizes = [2, 32], strides = [1, 1]} : vector<2x128xf32> to vector<2x32xf32>
    %270 = vector.extract_strided_slice %265 {offsets = [0, 96], sizes = [2, 32], strides = [1, 1]} : vector<2x128xf32> to vector<2x32xf32>
    %271 = arith.mulf %268, %233 : vector<2x32xf32>
    %272 = arith.mulf %267, %269 : vector<2x32xf32>
    %273 = arith.addf %271, %272 : vector<2x32xf32>
    %274 = math.tanh %273 : vector<2x32xf32>
    %275 = arith.mulf %270, %274 : vector<2x32xf32>
    %276 = arith.truncf %253 : vector<2x32xf32> to vector<2x32xbf16>
    %cst_51 = arith.constant dense<0.000000e+00> : vector<2x128xf32>
    %277 = tpu.matmul %276, %25, %cst_51 {dimension_numbers = #tpu.dot_dimension_numbers<[1], [0], [0], [1], [0, 0, 1, 1], [], []>} : vector<2x32xbf16>, vector<32x128xbf16>, vector<2x128xf32> -> vector<2x128xf32>
    %278 = arith.addf %21, %277 : vector<2x128xf32>
    %279 = arith.negf %278 : vector<2x128xf32>
    %280 = math.exp %279 : vector<2x128xf32>
    %cst_52 = arith.constant 1.000000e+00 : f32
    %281 = vector.broadcast %cst_52 : f32 to vector<2x128xf32>
    %282 = arith.addf %281, %280 : vector<2x128xf32>
    %283 = arith.divf %281, %282 : vector<2x128xf32>
    %284 = math.tanh %278 : vector<2x128xf32>
    %285 = vector.extract_strided_slice %283 {offsets = [0, 0], sizes = [2, 32], strides = [1, 1]} : vector<2x128xf32> to vector<2x32xf32>
    %286 = vector.extract_strided_slice %283 {offsets = [0, 32], sizes = [2, 32], strides = [1, 1]} : vector<2x128xf32> to vector<2x32xf32>
    %287 = vector.extract_strided_slice %284 {offsets = [0, 64], sizes = [2, 32], strides = [1, 1]} : vector<2x128xf32> to vector<2x32xf32>
    %288 = vector.extract_strided_slice %283 {offsets = [0, 96], sizes = [2, 32], strides = [1, 1]} : vector<2x128xf32> to vector<2x32xf32>
    %289 = arith.mulf %286, %251 : vector<2x32xf32>
    %290 = arith.mulf %285, %287 : vector<2x32xf32>
    %291 = arith.addf %289, %290 : vector<2x32xf32>
    %292 = math.tanh %291 : vector<2x32xf32>
    %293 = arith.mulf %288, %292 : vector<2x32xf32>
    %294 = arith.truncf %275 : vector<2x32xf32> to vector<2x32xbf16>
    %cst_53 = arith.constant dense<0.000000e+00> : vector<2x128xf32>
    %295 = tpu.matmul %294, %27, %cst_53 {dimension_numbers = #tpu.dot_dimension_numbers<[1], [0], [0], [1], [0, 0, 1, 1], [], []>} : vector<2x32xbf16>, vector<32x128xbf16>, vector<2x128xf32> -> vector<2x128xf32>
    %296 = arith.truncf %293 : vector<2x32xf32> to vector<2x32xbf16>
    %cst_54 = arith.constant dense<0.000000e+00> : vector<2x128xf32>
    %297 = tpu.matmul %296, %29, %cst_54 {dimension_numbers = #tpu.dot_dimension_numbers<[1], [0], [0], [1], [0, 0, 1, 1], [], []>} : vector<2x32xbf16>, vector<32x128xbf16>, vector<2x128xf32> -> vector<2x128xf32>
    %298 = arith.addf %297, %295 : vector<2x128xf32>
    %299 = vector.broadcast %31 : vector<1x128xf32> to vector<2x128xf32>
    %300 = arith.addf %298, %299 : vector<2x128xf32>
    %301 = arith.negf %300 : vector<2x128xf32>
    %302 = math.exp %301 : vector<2x128xf32>
    %cst_55 = arith.constant 1.000000e+00 : f32
    %303 = vector.broadcast %cst_55 : f32 to vector<2x128xf32>
    %304 = arith.addf %303, %302 : vector<2x128xf32>
    %305 = arith.divf %303, %304 : vector<2x128xf32>
    %306 = math.tanh %300 : vector<2x128xf32>
    %307 = vector.extract_strided_slice %305 {offsets = [0, 0], sizes = [2, 32], strides = [1, 1]} : vector<2x128xf32> to vector<2x32xf32>
    %308 = vector.extract_strided_slice %305 {offsets = [0, 32], sizes = [2, 32], strides = [1, 1]} : vector<2x128xf32> to vector<2x32xf32>
    %309 = vector.extract_strided_slice %306 {offsets = [0, 64], sizes = [2, 32], strides = [1, 1]} : vector<2x128xf32> to vector<2x32xf32>
    %310 = vector.extract_strided_slice %305 {offsets = [0, 96], sizes = [2, 32], strides = [1, 1]} : vector<2x128xf32> to vector<2x32xf32>
    %311 = arith.mulf %308, %273 : vector<2x32xf32>
    %312 = arith.mulf %307, %309 : vector<2x32xf32>
    %313 = arith.addf %311, %312 : vector<2x32xf32>
    %314 = math.tanh %313 : vector<2x32xf32>
    %315 = arith.mulf %310, %314 : vector<2x32xf32>
    %316 = arith.truncf %293 : vector<2x32xf32> to vector<2x32xbf16>
    %cst_56 = arith.constant dense<0.000000e+00> : vector<2x128xf32>
    %317 = tpu.matmul %316, %25, %cst_56 {dimension_numbers = #tpu.dot_dimension_numbers<[1], [0], [0], [1], [0, 0, 1, 1], [], []>} : vector<2x32xbf16>, vector<32x128xbf16>, vector<2x128xf32> -> vector<2x128xf32>
    %318 = arith.addf %23, %317 : vector<2x128xf32>
    %319 = arith.negf %318 : vector<2x128xf32>
    %320 = math.exp %319 : vector<2x128xf32>
    %cst_57 = arith.constant 1.000000e+00 : f32
    %321 = vector.broadcast %cst_57 : f32 to vector<2x128xf32>
    %322 = arith.addf %321, %320 : vector<2x128xf32>
    %323 = arith.divf %321, %322 : vector<2x128xf32>
    %324 = math.tanh %318 : vector<2x128xf32>
    %325 = vector.extract_strided_slice %323 {offsets = [0, 0], sizes = [2, 32], strides = [1, 1]} : vector<2x128xf32> to vector<2x32xf32>
    %326 = vector.extract_strided_slice %323 {offsets = [0, 32], sizes = [2, 32], strides = [1, 1]} : vector<2x128xf32> to vector<2x32xf32>
    %327 = vector.extract_strided_slice %324 {offsets = [0, 64], sizes = [2, 32], strides = [1, 1]} : vector<2x128xf32> to vector<2x32xf32>
    %328 = vector.extract_strided_slice %323 {offsets = [0, 96], sizes = [2, 32], strides = [1, 1]} : vector<2x128xf32> to vector<2x32xf32>
    %329 = arith.mulf %326, %291 : vector<2x32xf32>
    %330 = arith.mulf %325, %327 : vector<2x32xf32>
    %331 = arith.addf %329, %330 : vector<2x32xf32>
    %332 = math.tanh %331 : vector<2x32xf32>
    %333 = arith.mulf %328, %332 : vector<2x32xf32>
    %334 = arith.truncf %315 : vector<2x32xf32> to vector<2x32xbf16>
    %cst_58 = arith.constant dense<0.000000e+00> : vector<2x128xf32>
    %335 = tpu.matmul %334, %27, %cst_58 {dimension_numbers = #tpu.dot_dimension_numbers<[1], [0], [0], [1], [0, 0, 1, 1], [], []>} : vector<2x32xbf16>, vector<32x128xbf16>, vector<2x128xf32> -> vector<2x128xf32>
    %336 = arith.truncf %333 : vector<2x32xf32> to vector<2x32xbf16>
    %cst_59 = arith.constant dense<0.000000e+00> : vector<2x128xf32>
    %337 = tpu.matmul %336, %29, %cst_59 {dimension_numbers = #tpu.dot_dimension_numbers<[1], [0], [0], [1], [0, 0, 1, 1], [], []>} : vector<2x32xbf16>, vector<32x128xbf16>, vector<2x128xf32> -> vector<2x128xf32>
    %338 = arith.addf %337, %335 : vector<2x128xf32>
    %339 = vector.broadcast %31 : vector<1x128xf32> to vector<2x128xf32>
    %340 = arith.addf %338, %339 : vector<2x128xf32>
    %341 = arith.negf %340 : vector<2x128xf32>
    %342 = math.exp %341 : vector<2x128xf32>
    %cst_60 = arith.constant 1.000000e+00 : f32
    %343 = vector.broadcast %cst_60 : f32 to vector<2x128xf32>
    %344 = arith.addf %343, %342 : vector<2x128xf32>
    %345 = arith.divf %343, %344 : vector<2x128xf32>
    %346 = math.tanh %340 : vector<2x128xf32>
    %347 = vector.extract_strided_slice %345 {offsets = [0, 0], sizes = [2, 32], strides = [1, 1]} : vector<2x128xf32> to vector<2x32xf32>
    %348 = vector.extract_strided_slice %345 {offsets = [0, 32], sizes = [2, 32], strides = [1, 1]} : vector<2x128xf32> to vector<2x32xf32>
    %349 = vector.extract_strided_slice %346 {offsets = [0, 64], sizes = [2, 32], strides = [1, 1]} : vector<2x128xf32> to vector<2x32xf32>
    %350 = vector.extract_strided_slice %345 {offsets = [0, 96], sizes = [2, 32], strides = [1, 1]} : vector<2x128xf32> to vector<2x32xf32>
    %351 = arith.mulf %348, %313 : vector<2x32xf32>
    %352 = arith.mulf %347, %349 : vector<2x32xf32>
    %353 = arith.addf %351, %352 : vector<2x32xf32>
    %354 = math.tanh %353 : vector<2x32xf32>
    %355 = arith.mulf %350, %354 : vector<2x32xf32>
    %c0_61 = arith.constant 0 : index
    %c0_62 = arith.constant 0 : index
    %356 = vector.load %arg5[%c0_61, %c0_62] : memref<1x32xf32, #tpu.memory_space<vmem>>, vector<1x32xf32>
    %357 = vector.broadcast %356 : vector<1x32xf32> to vector<2x32xf32>
    %358 = arith.mulf %355, %357 : vector<2x32xf32>
    %cst_63 = arith.constant dense<0.000000e+00> : vector<2xf32>
    %359 = vector.multi_reduction <add>, %358, %cst_63 [1] : vector<2x32xf32> to vector<2xf32>
    %360 = vector.shape_cast %359 : vector<2xf32> to vector<2x1xf32>
    %c0_64 = arith.constant 0 : index
    %c0_65 = arith.constant 0 : index
    %361 = vector.load %arg6[%c0_64, %c0_65] : memref<1x1xf32, #tpu.memory_space<vmem>>, vector<1x1xf32>
    %362 = vector.broadcast %361 : vector<1x1xf32> to vector<2x1xf32>
    %363 = arith.addf %360, %362 : vector<2x1xf32>
    %c0_66 = arith.constant 0 : index
    %c0_67 = arith.constant 0 : index
    %364 = vector.load %arg7[%c0_66, %c0_67] : memref<2x1xf32, #tpu.memory_space<vmem>>, vector<2x1xf32>
    tpu.vector_store %arg7[%c0_66, %c0_67], %363 {strides = array<i32>} : memref<2x1xf32, #tpu.memory_space<vmem>>, vector<2x1xf32>,
    return
  }
}

</mosaic_0001>

<llo_original>
// kernel: temperature_lstm_forward.1
$region0: #{temperature_lstm_forward.1}
  #allocation0 [shape = 'u32[]', space=smem, size = 0x4, offset = 0x4, fixed_abs, tag = 'smem constant byte address 0x4 - core index']
  #allocation1 [shape = 'u32[144,128]{1,0:T(1,128)}', space=vmem, size = 0x12000, scoped, tag = 'internal scratch']
  #allocation2 [shape = 'f32[1,1]{1,0:T(1,128)S(1)}', space=vmem, size = 0x200, scoped, tag = 'scoped memory for temperature_lstm_forward.1']
  %s0 = inlined_call_operand.vmem [shape: f32[16,4], index: 0, kind: input, shape index: {}]
  %s1 = inlined_call_operand.vmem [shape: f32[4,128], index: 1, kind: input, shape index: {}]
  %s2 = inlined_call_operand.vmem [shape: bf16[1,32,128], index: 2, kind: input, shape index: {}]
  %s3 = inlined_call_operand.vmem [shape: bf16[2,32,128], index: 3, kind: input, shape index: {}]
  %s4 = inlined_call_operand.vmem [shape: f32[2,1,128], index: 4, kind: input, shape index: {}]
  %s5 = inlined_call_operand.vmem [shape: f32[1,32], index: 5, kind: input, shape index: {}]
  %s6 = inlined_call_operand.<no memory space> [shape: f32[1,1], index: 6, kind: input, shape index: {}]
  %s7 = inlined_call_operand.vmem [shape: f32[2,1], index: 7, kind: output, shape index: {}]
  %s8 = sld [smem:[#allocation0]]
  $region38: #{temperature_lstm_forward.1} parent=0
    _
  %s10 = ssub.s32 1, %s8
  %s11 = scalar_select 0, %s10, %s8
  %v12 = vstv %s6
  %13 = vst [vmem:[#allocation2] sm:$0x1] %v12
  // Predicated region
  $region2: #{temperature_lstm_forward.1} parent=0 // pred_check
    _
  $region3: #{temperature_lstm_forward.1} parent=0 // pred_check_branch
    %15 = sbr.rel (0) target = $region5
  $region4: #{temperature_lstm_forward.1} parent=0 // pred_region
    _
  $region5: #{temperature_lstm_forward.1} parent=0 // pred_fallthru
    _
  // Predicated region
  $region6: #{temperature_lstm_forward.1} parent=0 // pred_check
    _
  $region7: #{temperature_lstm_forward.1} parent=0 // pred_check_branch
    %17 = sbr.rel (0) target = $region9
  $region8: #{temperature_lstm_forward.1} parent=0 // pred_region
    _
  $region9: #{temperature_lstm_forward.1} parent=0 // pred_fallthru
    _
  // Predicated region
  $region10: #{temperature_lstm_forward.1} parent=0 // pred_check
    _
  $region11: #{temperature_lstm_forward.1} parent=0 // pred_check_branch
    %19 = sbr.rel (0) target = $region13
  $region12: #{temperature_lstm_forward.1} parent=0 // pred_region
    _
  $region13: #{temperature_lstm_forward.1} parent=0 // pred_fallthru
    _
  // Predicated region
  $region14: #{temperature_lstm_forward.1} parent=0 // pred_check
    _
  $region15: #{temperature_lstm_forward.1} parent=0 // pred_check_branch
    %21 = sbr.rel (0) target = $region17
  $region16: #{temperature_lstm_forward.1} parent=0 // pred_region
    _
  $region17: #{temperature_lstm_forward.1} parent=0 // pred_fallthru
    _
  // Predicated region
  $region18: #{temperature_lstm_forward.1} parent=0 // pred_check
    _
  $region19: #{temperature_lstm_forward.1} parent=0 // pred_check_branch
    %23 = sbr.rel (0) target = $region21
  $region20: #{temperature_lstm_forward.1} parent=0 // pred_region
    _
  $region21: #{temperature_lstm_forward.1} parent=0 // pred_fallthru
    _
  // Predicated region
  $region22: #{temperature_lstm_forward.1} parent=0 // pred_check
    _
  $region23: #{temperature_lstm_forward.1} parent=0 // pred_check_branch
    %25 = sbr.rel (0) target = $region25
  $region24: #{temperature_lstm_forward.1} parent=0 // pred_region
    _
  $region25: #{temperature_lstm_forward.1} parent=0 // pred_fallthru
    _
  // Predicated region
  $region26: #{temperature_lstm_forward.1} parent=0 // pred_check
    _
  $region27: #{temperature_lstm_forward.1} parent=0 // pred_check_branch
    %27 = sbr.rel (0) target = $region29
  $region28: #{temperature_lstm_forward.1} parent=0 // pred_region
    _
  $region29: #{temperature_lstm_forward.1} parent=0 // pred_fallthru
    _
  %v29 = vld [vmem:[%s0] sm:$0xff]
  %v30 = vld [vmem:[%s0 + $0x8] sm:$0xff]
  %v31 = vld [vmem:[%s1] sm:$0xf]
  %v32 = vld [vmem:[%s4] sm:$0x1]
  %v34 = vlaneseq
  %v35 = vshrl.u32 %v34, 7
  %v36 = vsub.s32 0, %v35
  %v37 = vrot.slane %v32, %v36
  %vm39 = vcmask 31744
  %v41 = vsel %vm39, %v29, 0
  %v44 = vsel %vm39, %v30, 0
  %vm46 = vcmask 1043456
  %v48 = vsel %vm46, %v31, 0
  %50 = vmatprep.subr.mxu0 0.0
  %51 = vmatpush1.msra.mxu0 0.0
  %52 = vmatprep.subr.mxu0 0.0
  %53 = vmatpush1.msra.mxu0 0.0
  %54 = vmatprep.subr.mxu0 0.0
  %55 = vmatpush1.msra.mxu0 0.0
  %56 = vmatprep.subr.mxu0 0.0
  %57 = vmatpush1.msra.mxu0 0.0
  %58 = vmatprep.subr.mxu0 0.0
  %59 = vmatpush1.msra.mxu0 0.0
  %60 = vmatprep.subr.mxu0 0.0
  %61 = vmatpush1.msra.mxu0 0.0
  %62 = vmatprep.subr.mxu0 0.0
  %63 = vmatpush1.msra.mxu0 0.0
  %64 = vmatprep.subr.mxu0 0.0
  %65 = vmatpush1.msra.mxu0 0.0
  %66 = vmatprep.subr.mxu0 0.0
  %67 = vmatpush1.msra.mxu0 0.0
  %68 = vmatprep.subr.mxu0 0.0
  %69 = vmatpush1.msra.mxu0 0.0
  %70 = vmatprep.subr.mxu0 0.0
  %71 = vmatpush1.msra.mxu0 0.0
  %72 = vmatprep.subr.mxu0 0.0
  %73 = vmatpush1.msra.mxu0 0.0
  %74 = vmatprep.subr.mxu0 0.0
  %75 = vmatpush1.msra.mxu0 0.0
  %76 = vmatprep.subr.mxu0 0.0
  %77 = vmatpush1.msra.mxu0 0.0
  %78 = vmatprep.subr.mxu0 0.0
  %79 = vmatpush1.msra.mxu0 0.0
  %80 = vmatprep.subr.mxu0 0.0
  %81 = vmatpush1.msra.mxu0 %v48
  %82 = vmatprep.subr.mxu0 0.0
  %83 = vmatpush2.msra.mxu0 0.0
  %84 = vmatprep.subr.mxu0 0.0
  %85 = vmatpush2.msra.mxu0 0.0
  %86 = vmatprep.subr.mxu0 0.0
  %87 = vmatpush2.msra.mxu0 0.0
  %88 = vmatprep.subr.mxu0 0.0
  %89 = vmatpush2.msra.mxu0 0.0
  %90 = vmatprep.subr.mxu0 0.0
  %91 = vmatpush2.msra.mxu0 0.0
  %92 = vmatprep.subr.mxu0 0.0
  %93 = vmatpush2.msra.mxu0 0.0
  %94 = vmatprep.subr.mxu0 0.0
  %95 = vmatpush2.msra.mxu0 0.0
  %96 = vmatprep.subr.mxu0 0.0
  %97 = vmatpush2.msra.mxu0 0.0
  %98 = vmatprep.subr.mxu0 0.0
  %99 = vmatpush2.msra.mxu0 0.0
  %100 = vmatprep.subr.mxu0 0.0
  %101 = vmatpush2.msra.mxu0 0.0
  %102 = vmatprep.subr.mxu0 0.0
  %103 = vmatpush2.msra.mxu0 0.0
  %104 = vmatprep.subr.mxu0 0.0
  %105 = vmatpush2.msra.mxu0 0.0
  %106 = vmatprep.subr.mxu0 0.0
  %107 = vmatpush2.msra.mxu0 0.0
  %108 = vmatprep.subr.mxu0 0.0
  %109 = vmatpush2.msra.mxu0 0.0
  %110 = vmatprep.subr.mxu0 0.0
  %111 = vmatpush2.msra.mxu0 0.0
  %112 = vmatprep.subr.mxu0 0.0
  %113 = vmatpush2.msra.mxu0 0.0
  %114 = vmatprep.mubr.f32.mxu0 0.0
  %115 = vmatmul.mubr.f32.gmra.mxu0 %v41
  %v116 = vpop.f32.mrf.mxu0
  %v117 = vadd.f32 %v37, %v116
  %v118 = vpop.f32.mrf.mxu0
  %119 = vmatprep.mubr.f32.mxu0 0.0
  %120 = vmatmul.mubr.f32.gmra.mxu0 %v44
  %v121 = vpop.f32.mrf.mxu0
  %v122 = vadd.f32 %v37, %v121
  %v123 = vpop.f32.mrf.mxu0
  %124 = vdwg.mxu0
  %v125 = vld [vmem:[%s3] sm:$0xf]
  %v126 = vld [vmem:[%s3 + $0x4] sm:$0xf]
  %v127 = vld [vmem:[%s3 + $0x8] sm:$0xf]
  %v128 = vld [vmem:[%s3 + $0xc] sm:$0xf]
  %s129 = scalar_lea.vmem %s3, 16
  %v130 = vld [vmem:[%s129] sm:$0xf]
  %v131 = vld [vmem:[%s129 + $0x4] sm:$0xf]
  %v132 = vld [vmem:[%s129 + $0x8] sm:$0xf]
  %v133 = vld [vmem:[%s129 + $0xc] sm:$0xf]
  %v134 = vld [vmem:[%s2] sm:$0xf]
  %v135 = vld [vmem:[%s2 + $0x4] sm:$0xf]
  %v136 = vld [vmem:[%s2 + $0x8] sm:$0xf]
  %v137 = vld [vmem:[%s2 + $0xc] sm:$0xf]
  %s138 = scalar_lea.vmem %s4, 1
  %v139 = vld [vmem:[%s138] sm:$0x1]
  %v144 = vunpack.c.l.b16 %v125
  %v145 = vunpack.c.l.b16 %v126
  %v146 = vunpack.c.l.b16 %v127
  %v147 = vunpack.c.l.b16 %v128
  %v148 = vpack.c.b16 %v145, %v144
  %v149 = vpack.c.b16 %v147, %v146
  %vm152 = vcmask 261120
  %v154 = vsel %vm152, 0, 0
  %156 = vmatprep.subr.bf16.mxu0 0
  %157 = vmatpush1.bf16.msra.mxu0 0
  %158 = vmatprep.subr.bf16.mxu0 0
  %159 = vmatpush1.bf16.msra.mxu0 0
  %160 = vmatprep.subr.bf16.mxu0 0
  %161 = vmatpush1.bf16.msra.mxu0 0
  %162 = vmatprep.subr.bf16.mxu0 0
  %163 = vmatpush1.bf16.msra.mxu0 0
  %164 = vmatprep.subr.bf16.mxu0 0
  %165 = vmatpush1.bf16.msra.mxu0 0
  %166 = vmatprep.subr.bf16.mxu0 0
  %167 = vmatpush1.bf16.msra.mxu0 0
  %168 = vmatprep.subr.bf16.mxu0 0
  %169 = vmatpush1.bf16.msra.mxu0 %v149
  %170 = vmatprep.subr.bf16.mxu0 0
  %171 = vmatpush1.bf16.msra.mxu0 %v148
  %172 = vmatprep.subr.bf16.mxu0 0
  %173 = vmatpush2.bf16.msra.mxu0 0
  %174 = vmatprep.subr.bf16.mxu0 0
  %175 = vmatpush2.bf16.msra.mxu0 0
  %176 = vmatprep.subr.bf16.mxu0 0
  %177 = vmatpush2.bf16.msra.mxu0 0
  %178 = vmatprep.subr.bf16.mxu0 0
  %179 = vmatpush2.bf16.msra.mxu0 0
  %180 = vmatprep.subr.bf16.mxu0 0
  %181 = vmatpush2.bf16.msra.mxu0 0
  %182 = vmatprep.subr.bf16.mxu0 0
  %183 = vmatpush2.bf16.msra.mxu0 0
  %184 = vmatprep.subr.bf16.mxu0 0
  %185 = vmatpush2.bf16.msra.mxu0 0
  %186 = vmatprep.subr.bf16.mxu0 0
  %187 = vmatpush2.bf16.msra.mxu0 0
  %188 = vmatprep.mubr.bf16.mxu0 0
  %189 = vmatmul.mubr.bf16.gmra.mxu0 %v154
  %v190 = vpop.f32.mrf.mxu0
  %v191 = vadd.f32 0.0, %v190
  %v192 = vpop.f32.mrf.mxu0
  %v193 = vpop.f32.mrf.mxu0
  %v194 = vpop.f32.mrf.mxu0
  %195 = vdwg.mxu0
  %v197 = vrot.slane %v191, 1
  %v200 = vadd.f32 %v117, %v191
  %v201 = vadd.f32 %v122, %v197
  %v202 = vxor.u32 %v200, 2147483648
  %v203 = vxor.u32 %v201, 2147483648
  %v204 = vmul.f32 %v202, 1.442695
  %v205 = vpow.pop %v204
  %v206 = vmul.f32 %v203, 1.442695
  %v207 = vpow.pop %v206
  %v208 = vadd.f32 %v205, 1.0
  %v209 = vadd.f32 %v207, 1.0
  %v210 = vrcp.pop %v208
  %v211 = vmul.f32 1.0, %v210
  %v212 = vrcp.pop %v209
  %v213 = vmul.f32 1.0, %v212
  %v214 = vtanh.pop %v200
  %v215 = vtanh.pop %v201
  %v216 = vmul.f32 %v211, 0.0
  %v217 = vmul.f32 %v213, 0.0
  %220 = vrot.lane.b32.xlu0 %v214, 64
  %v221 = vpop.permute.xlu0 %220
  %222 = vrot.lane.b32.xlu0 %v215, 64
  %v223 = vpop.permute.xlu0 %222
  %v226 = vmul.f32 %v211, %v221
  %v227 = vmul.f32 %v213, %v223
  %230 = vrot.lane.b32.xlu0 %v226, 32
  %v231 = vpop.permute.xlu0 %230
  %232 = vrot.lane.b32.xlu0 %v227, 32
  %v233 = vpop.permute.xlu0 %232
  %v236 = vadd.f32 %v216, %v231
  %v237 = vadd.f32 %v217, %v233
  %v238 = vtanh.pop %v236
  %v239 = vtanh.pop %v237
  %242 = vrot.lane.b32.xlu0 %v238, 64
  %v243 = vpop.permute.xlu0 %242
  %244 = vrot.lane.b32.xlu0 %v239, 64
  %v245 = vpop.permute.xlu0 %244
  %v248 = vmul.f32 %v211, %v243
  %v249 = vmul.f32 %v213, %v245
  %v254 = vunpack.c.l.b16 %v130
  %v255 = vunpack.c.l.b16 %v131
  %v256 = vunpack.c.l.b16 %v132
  %v257 = vunpack.c.l.b16 %v133
  %v258 = vpack.c.b16 %v255, %v254
  %v259 = vpack.c.b16 %v257, %v256
  %262 = vmatprep.subr.bf16.mxu0 0
  %263 = vmatpush1.bf16.msra.mxu0 0
  %264 = vmatprep.subr.bf16.mxu0 0
  %265 = vmatpush1.bf16.msra.mxu0 0
  %266 = vmatprep.subr.bf16.mxu0 0
  %267 = vmatpush1.bf16.msra.mxu0 0
  %268 = vmatprep.subr.bf16.mxu0 0
  %269 = vmatpush1.bf16.msra.mxu0 0
  %270 = vmatprep.subr.bf16.mxu0 0
  %271 = vmatpush1.bf16.msra.mxu0 0
  %272 = vmatprep.subr.bf16.mxu0 0
  %273 = vmatpush1.bf16.msra.mxu0 0
  %274 = vmatprep.subr.bf16.mxu0 0
  %275 = vmatpush1.bf16.msra.mxu0 %v259
  %276 = vmatprep.subr.bf16.mxu0 0
  %277 = vmatpush1.bf16.msra.mxu0 %v258
  %278 = vmatprep.subr.bf16.mxu0 0
  %279 = vmatpush2.bf16.msra.mxu0 0
  %280 = vmatprep.subr.bf16.mxu0 0
  %281 = vmatpush2.bf16.msra.mxu0 0
  %282 = vmatprep.subr.bf16.mxu0 0
  %283 = vmatpush2.bf16.msra.mxu0 0
  %284 = vmatprep.subr.bf16.mxu0 0
  %285 = vmatpush2.bf16.msra.mxu0 0
  %286 = vmatprep.subr.bf16.mxu0 0
  %287 = vmatpush2.bf16.msra.mxu0 0
  %288 = vmatprep.subr.bf16.mxu0 0
  %289 = vmatpush2.bf16.msra.mxu0 0
  %290 = vmatprep.subr.bf16.mxu0 0
  %291 = vmatpush2.bf16.msra.mxu0 0
  %292 = vmatprep.subr.bf16.mxu0 0
  %293 = vmatpush2.bf16.msra.mxu0 0
  %294 = vmatprep.mubr.bf16.mxu0 0
  %295 = vmatmul.mubr.bf16.gmra.mxu0 %v154
  %v296 = vpop.f32.mrf.mxu0
  %v297 = vadd.f32 0.0, %v296
  %v298 = vpop.f32.mrf.mxu0
  %v299 = vpop.f32.mrf.mxu0
  %v300 = vpop.f32.mrf.mxu0
  %301 = vdwg.mxu0
  %v302 = vpack.c.bf16 %v248, %v248
  %v303 = vpack.c.bf16 %v249, %v249
  %v306 = vunpack.c.l.b16 %v302
  %v307 = vunpack.c.l.b16 %v303
  %v308 = vrot.slane %v307, 7
  %vm309 = vcmask 1041409
  %v310 = vsel %vm309, %v308, %v306
  %v311 = vpack.c.b16 %v310, %v310
  %312 = vrot.lane.b32.xlu0 %v311, 32
  %v313 = vpop.permute.xlu0 %312
  %v318 = vunpack.c.l.b16 %v134
  %v319 = vunpack.c.l.b16 %v135
  %v320 = vunpack.c.l.b16 %v136
  %v321 = vunpack.c.l.b16 %v137
  %v322 = vpack.c.b16 %v319, %v318
  %v323 = vpack.c.b16 %v321, %v320
  %v327 = vsel %vm152, %v313, 0
  %329 = vmatprep.subr.bf16.mxu0 0
  %330 = vmatpush1.bf16.msra.mxu0 0
  %331 = vmatprep.subr.bf16.mxu0 0
  %332 = vmatpush1.bf16.msra.mxu0 0
  %333 = vmatprep.subr.bf16.mxu0 0
  %334 = vmatpush1.bf16.msra.mxu0 0
  %335 = vmatprep.subr.bf16.mxu0 0
  %336 = vmatpush1.bf16.msra.mxu0 0
  %337 = vmatprep.subr.bf16.mxu0 0
  %338 = vmatpush1.bf16.msra.mxu0 0
  %339 = vmatprep.subr.bf16.mxu0 0
  %340 = vmatpush1.bf16.msra.mxu0 0
  %341 = vmatprep.subr.bf16.mxu0 0
  %342 = vmatpush1.bf16.msra.mxu0 %v323
  %343 = vmatprep.subr.bf16.mxu0 0
  %344 = vmatpush1.bf16.msra.mxu0 %v322
  %345 = vmatprep.subr.bf16.mxu0 0
  %346 = vmatpush2.bf16.msra.mxu0 0
  %347 = vmatprep.subr.bf16.mxu0 0
  %348 = vmatpush2.bf16.msra.mxu0 0
  %349 = vmatprep.subr.bf16.mxu0 0
  %350 = vmatpush2.bf16.msra.mxu0 0
  %351 = vmatprep.subr.bf16.mxu0 0
  %352 = vmatpush2.bf16.msra.mxu0 0
  %353 = vmatprep.subr.bf16.mxu0 0
  %354 = vmatpush2.bf16.msra.mxu0 0
  %355 = vmatprep.subr.bf16.mxu0 0
  %356 = vmatpush2.bf16.msra.mxu0 0
  %357 = vmatprep.subr.bf16.mxu0 0
  %358 = vmatpush2.bf16.msra.mxu0 0
  %359 = vmatprep.subr.bf16.mxu0 0
  %360 = vmatpush2.bf16.msra.mxu0 0
  %361 = vmatprep.mubr.bf16.mxu0 0
  %362 = vmatmul.mubr.bf16.gmra.mxu0 %v327
  %v363 = vpop.f32.mrf.mxu0
  %v364 = vadd.f32 %v297, %v363
  %v365 = vpop.f32.mrf.mxu0
  %v366 = vpop.f32.mrf.mxu0
  %v367 = vpop.f32.mrf.mxu0
  %368 = vdwg.mxu0
  %v370 = vlaneseq
  %v371 = vshrl.u32 %v370, 7
  %v372 = vsub.s32 0, %v371
  %v373 = vrot.slane %v139, %v372
  %v375 = vadd.f32 %v364, %v373
  %v376 = vxor.u32 %v375, 2147483648
  %v377 = vmul.f32 %v376, 1.442695
  %v378 = vpow.pop %v377
  %v379 = vadd.f32 %v378, 1.0
  %v380 = vrcp.pop %v379
  %v381 = vmul.f32 1.0, %v380
  %v382 = vtanh.pop %v375
  %v383 = vmul.f32 %v381, 0.0
  %385 = vrot.lane.b32.xlu0 %v382, 64
  %v386 = vpop.permute.xlu0 %385
  %v388 = vmul.f32 %v381, %v386
  %390 = vrot.lane.b32.xlu0 %v388, 32
  %v391 = vpop.permute.xlu0 %390
  %v393 = vadd.f32 %v383, %v391
  %v394 = vtanh.pop %v393
  %396 = vrot.lane.b32.xlu0 %v394, 64
  %v397 = vpop.permute.xlu0 %396
  %v399 = vmul.f32 %v381, %v397
  %400 = vmatprep.subr.bf16.mxu0 0
  %401 = vmatpush1.bf16.msra.mxu0 0
  %402 = vmatprep.subr.bf16.mxu0 0
  %403 = vmatpush1.bf16.msra.mxu0 0
  %404 = vmatprep.subr.bf16.mxu0 0
  %405 = vmatpush1.bf16.msra.mxu0 0
  %406 = vmatprep.subr.bf16.mxu0 0
  %407 = vmatpush1.bf16.msra.mxu0 0
  %408 = vmatprep.subr.bf16.mxu0 0
  %409 = vmatpush1.bf16.msra.mxu0 0
  %410 = vmatprep.subr.bf16.mxu0 0
  %411 = vmatpush1.bf16.msra.mxu0 0
  %412 = vmatprep.subr.bf16.mxu0 0
  %413 = vmatpush1.bf16.msra.mxu0 %v149
  %414 = vmatprep.subr.bf16.mxu0 0
  %415 = vmatpush1.bf16.msra.mxu0 %v148
  %416 = vmatprep.subr.bf16.mxu0 0
  %417 = vmatpush2.bf16.msra.mxu0 0
  %418 = vmatprep.subr.bf16.mxu0 0
  %419 = vmatpush2.bf16.msra.mxu0 0
  %420 = vmatprep.subr.bf16.mxu0 0
  %421 = vmatpush2.bf16.msra.mxu0 0
  %422 = vmatprep.subr.bf16.mxu0 0
  %423 = vmatpush2.bf16.msra.mxu0 0
  %424 = vmatprep.subr.bf16.mxu0 0
  %425 = vmatpush2.bf16.msra.mxu0 0
  %426 = vmatprep.subr.bf16.mxu0 0
  %427 = vmatpush2.bf16.msra.mxu0 0
  %428 = vmatprep.subr.bf16.mxu0 0
  %429 = vmatpush2.bf16.msra.mxu0 0
  %430 = vmatprep.subr.bf16.mxu0 0
  %431 = vmatpush2.bf16.msra.mxu0 0
  %432 = vmatprep.mubr.bf16.mxu0 0
  %433 = vmatmul.mubr.bf16.gmra.mxu0 %v327
  %v434 = vpop.f32.mrf.mxu0
  %v435 = vadd.f32 0.0, %v434
  %v436 = vpop.f32.mrf.mxu0
  %v437 = vpop.f32.mrf.mxu0
  %v438 = vpop.f32.mrf.mxu0
  %439 = vdwg.mxu0
  %v441 = vrot.slane %v435, 7
  %v444 = vadd.f32 %v117, %v441
  %v445 = vadd.f32 %v122, %v435
  %v446 = vxor.u32 %v444, 2147483648
  %v447 = vxor.u32 %v445, 2147483648
  %v448 = vmul.f32 %v446, 1.442695
  %v449 = vpow.pop %v448
  %v450 = vmul.f32 %v447, 1.442695
  %v451 = vpow.pop %v450
  %v452 = vadd.f32 %v449, 1.0
  %v453 = vadd.f32 %v451, 1.0
  %v454 = vrcp.pop %v452
  %v455 = vmul.f32 1.0, %v454
  %v456 = vrcp.pop %v453
  %v457 = vmul.f32 1.0, %v456
  %v458 = vtanh.pop %v444
  %v459 = vtanh.pop %v445
  %v462 = vrot.slane %v236, 7
  %v463 = vrot.slane %v237, 7
  %v466 = vmul.f32 %v455, %v462
  %v467 = vmul.f32 %v457, %v463
  %470 = vrot.lane.b32.xlu0 %v458, 64
  %v471 = vpop.permute.xlu0 %470
  %472 = vrot.lane.b32.xlu0 %v459, 64
  %v473 = vpop.permute.xlu0 %472
  %v476 = vmul.f32 %v455, %v471
  %v477 = vmul.f32 %v457, %v473
  %480 = vrot.lane.b32.xlu0 %v476, 32
  %v481 = vpop.permute.xlu0 %480
  %482 = vrot.lane.b32.xlu0 %v477, 32
  %v483 = vpop.permute.xlu0 %482
  %v486 = vadd.f32 %v466, %v481
  %v487 = vadd.f32 %v467, %v483
  %v488 = vtanh.pop %v486
  %v489 = vtanh.pop %v487
  %492 = vrot.lane.b32.xlu0 %v488, 64
  %v493 = vpop.permute.xlu0 %492
  %494 = vrot.lane.b32.xlu0 %v489, 64
  %v495 = vpop.permute.xlu0 %494
  %v498 = vmul.f32 %v455, %v493
  %v499 = vmul.f32 %v457, %v495
  %v500 = vpack.c.bf16 %v399, %v399
  %502 = vrot.lane.b32.xlu0 %v500, 32
  %v503 = vpop.permute.xlu0 %502
  %v505 = vsel %vm152, %v503, 0
  %507 = vmatprep.subr.bf16.mxu0 0
  %508 = vmatpush1.bf16.msra.mxu0 0
  %509 = vmatprep.subr.bf16.mxu0 0
  %510 = vmatpush1.bf16.msra.mxu0 0
  %511 = vmatprep.subr.bf16.mxu0 0
  %512 = vmatpush1.bf16.msra.mxu0 0
  %513 = vmatprep.subr.bf16.mxu0 0
  %514 = vmatpush1.bf16.msra.mxu0 0
  %515 = vmatprep.subr.bf16.mxu0 0
  %516 = vmatpush1.bf16.msra.mxu0 0
  %517 = vmatprep.subr.bf16.mxu0 0
  %518 = vmatpush1.bf16.msra.mxu0 0
  %519 = vmatprep.subr.bf16.mxu0 0
  %520 = vmatpush1.bf16.msra.mxu0 %v259
  %521 = vmatprep.subr.bf16.mxu0 0
  %522 = vmatpush1.bf16.msra.mxu0 %v258
  %523 = vmatprep.subr.bf16.mxu0 0
  %524 = vmatpush2.bf16.msra.mxu0 0
  %525 = vmatprep.subr.bf16.mxu0 0
  %526 = vmatpush2.bf16.msra.mxu0 0
  %527 = vmatprep.subr.bf16.mxu0 0
  %528 = vmatpush2.bf16.msra.mxu0 0
  %529 = vmatprep.subr.bf16.mxu0 0
  %530 = vmatpush2.bf16.msra.mxu0 0
  %531 = vmatprep.subr.bf16.mxu0 0
  %532 = vmatpush2.bf16.msra.mxu0 0
  %533 = vmatprep.subr.bf16.mxu0 0
  %534 = vmatpush2.bf16.msra.mxu0 0
  %535 = vmatprep.subr.bf16.mxu0 0
  %536 = vmatpush2.bf16.msra.mxu0 0
  %537 = vmatprep.subr.bf16.mxu0 0
  %538 = vmatpush2.bf16.msra.mxu0 0
  %539 = vmatprep.mubr.bf16.mxu0 0
  %540 = vmatmul.mubr.bf16.gmra.mxu0 %v505
  %v541 = vpop.f32.mrf.mxu0
  %v542 = vadd.f32 0.0, %v541
  %v543 = vpop.f32.mrf.mxu0
  %v544 = vpop.f32.mrf.mxu0
  %v545 = vpop.f32.mrf.mxu0
  %546 = vdwg.mxu0
  %v547 = vpack.c.bf16 %v498, %v498
  %v548 = vpack.c.bf16 %v499, %v499
  %v551 = vunpack.c.l.b16 %v547
  %v552 = vunpack.c.l.b16 %v548
  %v553 = vrot.slane %v551, 1
  %v554 = vsel %vm309, %v552, %v553
  %v555 = vpack.c.b16 %v554, %v554
  %556 = vrot.lane.b32.xlu0 %v555, 32
  %v557 = vpop.permute.xlu0 %556
  %v559 = vsel %vm152, %v557, 0
  %561 = vmatprep.subr.bf16.mxu0 0
  %562 = vmatpush1.bf16.msra.mxu0 0
  %563 = vmatprep.subr.bf16.mxu0 0
  %564 = vmatpush1.bf16.msra.mxu0 0
  %565 = vmatprep.subr.bf16.mxu0 0
  %566 = vmatpush1.bf16.msra.mxu0 0
  %567 = vmatprep.subr.bf16.mxu0 0
  %568 = vmatpush1.bf16.msra.mxu0 0
  %569 = vmatprep.subr.bf16.mxu0 0
  %570 = vmatpush1.bf16.msra.mxu0 0
  %571 = vmatprep.subr.bf16.mxu0 0
  %572 = vmatpush1.bf16.msra.mxu0 0
  %573 = vmatprep.subr.bf16.mxu0 0
  %574 = vmatpush1.bf16.msra.mxu0 %v323
  %575 = vmatprep.subr.bf16.mxu0 0
  %576 = vmatpush1.bf16.msra.mxu0 %v322
  %577 = vmatprep.subr.bf16.mxu0 0
  %578 = vmatpush2.bf16.msra.mxu0 0
  %579 = vmatprep.subr.bf16.mxu0 0
  %580 = vmatpush2.bf16.msra.mxu0 0
  %581 = vmatprep.subr.bf16.mxu0 0
  %582 = vmatpush2.bf16.msra.mxu0 0
  %583 = vmatprep.subr.bf16.mxu0 0
  %584 = vmatpush2.bf16.msra.mxu0 0
  %585 = vmatprep.subr.bf16.mxu0 0
  %586 = vmatpush2.bf16.msra.mxu0 0
  %587 = vmatprep.subr.bf16.mxu0 0
  %588 = vmatpush2.bf16.msra.mxu0 0
  %589 = vmatprep.subr.bf16.mxu0 0
  %590 = vmatpush2.bf16.msra.mxu0 0
  %591 = vmatprep.subr.bf16.mxu0 0
  %592 = vmatpush2.bf16.msra.mxu0 0
  %593 = vmatprep.mubr.bf16.mxu0 0
  %594 = vmatmul.mubr.bf16.gmra.mxu0 %v559
  %v595 = vpop.f32.mrf.mxu0
  %v596 = vadd.f32 %v542, %v595
  %v597 = vpop.f32.mrf.mxu0
  %v598 = vpop.f32.mrf.mxu0
  %v599 = vpop.f32.mrf.mxu0
  %600 = vdwg.mxu0
  %v601 = vadd.f32 %v596, %v373
  %v602 = vxor.u32 %v601, 2147483648
  %v603 = vmul.f32 %v602, 1.442695
  %v604 = vpow.pop %v603
  %v605 = vadd.f32 %v604, 1.0
  %v606 = vrcp.pop %v605
  %v607 = vmul.f32 1.0, %v606
  %v608 = vtanh.pop %v601
  %v609 = vmul.f32 %v607, %v393
  %611 = vrot.lane.b32.xlu0 %v608, 64
  %v612 = vpop.permute.xlu0 %611
  %v614 = vmul.f32 %v607, %v612
  %616 = vrot.lane.b32.xlu0 %v614, 32
  %v617 = vpop.permute.xlu0 %616
  %v619 = vadd.f32 %v609, %v617
  %v620 = vtanh.pop %v619
  %622 = vrot.lane.b32.xlu0 %v620, 64
  %v623 = vpop.permute.xlu0 %622
  %v625 = vmul.f32 %v607, %v623
  %626 = vmatprep.subr.bf16.mxu0 0
  %627 = vmatpush1.bf16.msra.mxu0 0
  %628 = vmatprep.subr.bf16.mxu0 0
  %629 = vmatpush1.bf16.msra.mxu0 0
  %630 = vmatprep.subr.bf16.mxu0 0
  %631 = vmatpush1.bf16.msra.mxu0 0
  %632 = vmatprep.subr.bf16.mxu0 0
  %633 = vmatpush1.bf16.msra.mxu0 0
  %634 = vmatprep.subr.bf16.mxu0 0
  %635 = vmatpush1.bf16.msra.mxu0 0
  %636 = vmatprep.subr.bf16.mxu0 0
  %637 = vmatpush1.bf16.msra.mxu0 0
  %638 = vmatprep.subr.bf16.mxu0 0
  %639 = vmatpush1.bf16.msra.mxu0 %v149
  %640 = vmatprep.subr.bf16.mxu0 0
  %641 = vmatpush1.bf16.msra.mxu0 %v148
  %642 = vmatprep.subr.bf16.mxu0 0
  %643 = vmatpush2.bf16.msra.mxu0 0
  %644 = vmatprep.subr.bf16.mxu0 0
  %645 = vmatpush2.bf16.msra.mxu0 0
  %646 = vmatprep.subr.bf16.mxu0 0
  %647 = vmatpush2.bf16.msra.mxu0 0
  %648 = vmatprep.subr.bf16.mxu0 0
  %649 = vmatpush2.bf16.msra.mxu0 0
  %650 = vmatprep.subr.bf16.mxu0 0
  %651 = vmatpush2.bf16.msra.mxu0 0
  %652 = vmatprep.subr.bf16.mxu0 0
  %653 = vmatpush2.bf16.msra.mxu0 0
  %654 = vmatprep.subr.bf16.mxu0 0
  %655 = vmatpush2.bf16.msra.mxu0 0
  %656 = vmatprep.subr.bf16.mxu0 0
  %657 = vmatpush2.bf16.msra.mxu0 0
  %658 = vmatprep.mubr.bf16.mxu0 0
  %659 = vmatmul.mubr.bf16.gmra.mxu0 %v559
  %v660 = vpop.f32.mrf.mxu0
  %v661 = vadd.f32 0.0, %v660
  %v662 = vpop.f32.mrf.mxu0
  %v663 = vpop.f32.mrf.mxu0
  %v664 = vpop.f32.mrf.mxu0
  %665 = vdwg.mxu0
  %v667 = vrot.slane %v661, 6
  %v668 = vrot.slane %v661, 7
  %v671 = vadd.f32 %v117, %v667
  %v672 = vadd.f32 %v122, %v668
  %v673 = vxor.u32 %v671, 2147483648
  %v674 = vxor.u32 %v672, 2147483648
  %v675 = vmul.f32 %v673, 1.442695
  %v676 = vpow.pop %v675
  %v677 = vmul.f32 %v674, 1.442695
  %v678 = vpow.pop %v677
  %v679 = vadd.f32 %v676, 1.0
  %v680 = vadd.f32 %v678, 1.0
  %v681 = vrcp.pop %v679
  %v682 = vmul.f32 1.0, %v681
  %v683 = vrcp.pop %v680
  %v684 = vmul.f32 1.0, %v683
  %v685 = vtanh.pop %v671
  %v686 = vtanh.pop %v672
  %v689 = vrot.slane %v486, 7
  %v690 = vrot.slane %v487, 7
  %v693 = vmul.f32 %v682, %v689
  %v694 = vmul.f32 %v684, %v690
  %697 = vrot.lane.b32.xlu0 %v685, 64
  %v698 = vpop.permute.xlu0 %697
  %699 = vrot.lane.b32.xlu0 %v686, 64
  %v700 = vpop.permute.xlu0 %699
  %v703 = vmul.f32 %v682, %v698
  %v704 = vmul.f32 %v684, %v700
  %707 = vrot.lane.b32.xlu0 %v703, 32
  %v708 = vpop.permute.xlu0 %707
  %709 = vrot.lane.b32.xlu0 %v704, 32
  %v710 = vpop.permute.xlu0 %709
  %v713 = vadd.f32 %v693, %v708
  %v714 = vadd.f32 %v694, %v710
  %v715 = vtanh.pop %v713
  %v716 = vtanh.pop %v714
  %719 = vrot.lane.b32.xlu0 %v715, 64
  %v720 = vpop.permute.xlu0 %719
  %721 = vrot.lane.b32.xlu0 %v716, 64
  %v722 = vpop.permute.xlu0 %721
  %v725 = vmul.f32 %v682, %v720
  %v726 = vmul.f32 %v684, %v722
  %v727 = vpack.c.bf16 %v625, %v625
  %729 = vrot.lane.b32.xlu0 %v727, 32
  %v730 = vpop.permute.xlu0 %729
  %v732 = vsel %vm152, %v730, 0
  %734 = vmatprep.subr.bf16.mxu0 0
  %735 = vmatpush1.bf16.msra.mxu0 0
  %736 = vmatprep.subr.bf16.mxu0 0
  %737 = vmatpush1.bf16.msra.mxu0 0
  %738 = vmatprep.subr.bf16.mxu0 0
  %739 = vmatpush1.bf16.msra.mxu0 0
  %740 = vmatprep.subr.bf16.mxu0 0
  %741 = vmatpush1.bf16.msra.mxu0 0
  %742 = vmatprep.subr.bf16.mxu0 0
  %743 = vmatpush1.bf16.msra.mxu0 0
  %744 = vmatprep.subr.bf16.mxu0 0
  %745 = vmatpush1.bf16.msra.mxu0 0
  %746 = vmatprep.subr.bf16.mxu0 0
  %747 = vmatpush1.bf16.msra.mxu0 %v259
  %748 = vmatprep.subr.bf16.mxu0 0
  %749 = vmatpush1.bf16.msra.mxu0 %v258
  %750 = vmatprep.subr.bf16.mxu0 0
  %751 = vmatpush2.bf16.msra.mxu0 0
  %752 = vmatprep.subr.bf16.mxu0 0
  %753 = vmatpush2.bf16.msra.mxu0 0
  %754 = vmatprep.subr.bf16.mxu0 0
  %755 = vmatpush2.bf16.msra.mxu0 0
  %756 = vmatprep.subr.bf16.mxu0 0
  %757 = vmatpush2.bf16.msra.mxu0 0
  %758 = vmatprep.subr.bf16.mxu0 0
  %759 = vmatpush2.bf16.msra.mxu0 0
  %760 = vmatprep.subr.bf16.mxu0 0
  %761 = vmatpush2.bf16.msra.mxu0 0
  %762 = vmatprep.subr.bf16.mxu0 0
  %763 = vmatpush2.bf16.msra.mxu0 0
  %764 = vmatprep.subr.bf16.mxu0 0
  %765 = vmatpush2.bf16.msra.mxu0 0
  %766 = vmatprep.mubr.bf16.mxu0 0
  %767 = vmatmul.mubr.bf16.gmra.mxu0 %v732
  %v768 = vpop.f32.mrf.mxu0
  %v769 = vadd.f32 0.0, %v768
  %v770 = vpop.f32.mrf.mxu0
  %v771 = vpop.f32.mrf.mxu0
  %v772 = vpop.f32.mrf.mxu0
  %773 = vdwg.mxu0
  %v774 = vpack.c.bf16 %v725, %v725
  %v775 = vpack.c.bf16 %v726, %v726
  %v778 = vunpack.c.l.b16 %v774
  %v779 = vunpack.c.l.b16 %v775
  %v780 = vrot.slane %v778, 2
  %v781 = vrot.slane %v779, 1
  %v782 = vsel %vm309, %v781, %v780
  %v783 = vpack.c.b16 %v782, %v782
  %784 = vrot.lane.b32.xlu0 %v783, 32
  %v785 = vpop.permute.xlu0 %784
  %v787 = vsel %vm152, %v785, 0
  %789 = vmatprep.subr.bf16.mxu0 0
  %790 = vmatpush1.bf16.msra.mxu0 0
  %791 = vmatprep.subr.bf16.mxu0 0
  %792 = vmatpush1.bf16.msra.mxu0 0
  %793 = vmatprep.subr.bf16.mxu0 0
  %794 = vmatpush1.bf16.msra.mxu0 0
  %795 = vmatprep.subr.bf16.mxu0 0
  %796 = vmatpush1.bf16.msra.mxu0 0
  %797 = vmatprep.subr.bf16.mxu0 0
  %798 = vmatpush1.bf16.msra.mxu0 0
  %799 = vmatprep.subr.bf16.mxu0 0
  %800 = vmatpush1.bf16.msra.mxu0 0
  %801 = vmatprep.subr.bf16.mxu0 0
  %802 = vmatpush1.bf16.msra.mxu0 %v323
  %803 = vmatprep.subr.bf16.mxu0 0
  %804 = vmatpush1.bf16.msra.mxu0 %v322
  %805 = vmatprep.subr.bf16.mxu0 0
  %806 = vmatpush2.bf16.msra.mxu0 0
  %807 = vmatprep.subr.bf16.mxu0 0
  %808 = vmatpush2.bf16.msra.mxu0 0
  %809 = vmatprep.subr.bf16.mxu0 0
  %810 = vmatpush2.bf16.msra.mxu0 0
  %811 = vmatprep.subr.bf16.mxu0 0
  %812 = vmatpush2.bf16.msra.mxu0 0
  %813 = vmatprep.subr.bf16.mxu0 0
  %814 = vmatpush2.bf16.msra.mxu0 0
  %815 = vmatprep.subr.bf16.mxu0 0
  %816 = vmatpush2.bf16.msra.mxu0 0
  %817 = vmatprep.subr.bf16.mxu0 0
  %818 = vmatpush2.bf16.msra.mxu0 0
  %819 = vmatprep.subr.bf16.mxu0 0
  %820 = vmatpush2.bf16.msra.mxu0 0
  %821 = vmatprep.mubr.bf16.mxu0 0
  %822 = vmatmul.mubr.bf16.gmra.mxu0 %v787
  %v823 = vpop.f32.mrf.mxu0
  %v824 = vadd.f32 %v769, %v823
  %v825 = vpop.f32.mrf.mxu0
  %v826 = vpop.f32.mrf.mxu0
  %v827 = vpop.f32.mrf.mxu0
  %828 = vdwg.mxu0
  %v829 = vadd.f32 %v824, %v373
  %v830 = vxor.u32 %v829, 2147483648
  %v831 = vmul.f32 %v830, 1.442695
  %v832 = vpow.pop %v831
  %v833 = vadd.f32 %v832, 1.0
  %v834 = vrcp.pop %v833
  %v835 = vmul.f32 1.0, %v834
  %v836 = vtanh.pop %v829
  %v837 = vmul.f32 %v835, %v619
  %839 = vrot.lane.b32.xlu0 %v836, 64
  %v840 = vpop.permute.xlu0 %839
  %v842 = vmul.f32 %v835, %v840
  %844 = vrot.lane.b32.xlu0 %v842, 32
  %v845 = vpop.permute.xlu0 %844
  %v847 = vadd.f32 %v837, %v845
  %v848 = vtanh.pop %v847
  %850 = vrot.lane.b32.xlu0 %v848, 64
  %v851 = vpop.permute.xlu0 %850
  %v853 = vmul.f32 %v835, %v851
  %854 = vmatprep.subr.bf16.mxu0 0
  %855 = vmatpush1.bf16.msra.mxu0 0
  %856 = vmatprep.subr.bf16.mxu0 0
  %857 = vmatpush1.bf16.msra.mxu0 0
  %858 = vmatprep.subr.bf16.mxu0 0
  %859 = vmatpush1.bf16.msra.mxu0 0
  %860 = vmatprep.subr.bf16.mxu0 0
  %861 = vmatpush1.bf16.msra.mxu0 0
  %862 = vmatprep.subr.bf16.mxu0 0
  %863 = vmatpush1.bf16.msra.mxu0 0
  %864 = vmatprep.subr.bf16.mxu0 0
  %865 = vmatpush1.bf16.msra.mxu0 0
  %866 = vmatprep.subr.bf16.mxu0 0
  %867 = vmatpush1.bf16.msra.mxu0 %v149
  %868 = vmatprep.subr.bf16.mxu0 0
  %869 = vmatpush1.bf16.msra.mxu0 %v148
  %870 = vmatprep.subr.bf16.mxu0 0
  %871 = vmatpush2.bf16.msra.mxu0 0
  %872 = vmatprep.subr.bf16.mxu0 0
  %873 = vmatpush2.bf16.msra.mxu0 0
  %874 = vmatprep.subr.bf16.mxu0 0
  %875 = vmatpush2.bf16.msra.mxu0 0
  %876 = vmatprep.subr.bf16.mxu0 0
  %877 = vmatpush2.bf16.msra.mxu0 0
  %878 = vmatprep.subr.bf16.mxu0 0
  %879 = vmatpush2.bf16.msra.mxu0 0
  %880 = vmatprep.subr.bf16.mxu0 0
  %881 = vmatpush2.bf16.msra.mxu0 0
  %882 = vmatprep.subr.bf16.mxu0 0
  %883 = vmatpush2.bf16.msra.mxu0 0
  %884 = vmatprep.subr.bf16.mxu0 0
  %885 = vmatpush2.bf16.msra.mxu0 0
  %886 = vmatprep.mubr.bf16.mxu0 0
  %887 = vmatmul.mubr.bf16.gmra.mxu0 %v787
  %v888 = vpop.f32.mrf.mxu0
  %v889 = vadd.f32 0.0, %v888
  %v890 = vpop.f32.mrf.mxu0
  %v891 = vpop.f32.mrf.mxu0
  %v892 = vpop.f32.mrf.mxu0
  %893 = vdwg.mxu0
  %v895 = vrot.slane %v889, 5
  %v896 = vrot.slane %v889, 6
  %v899 = vadd.f32 %v117, %v895
  %v900 = vadd.f32 %v122, %v896
  %v901 = vxor.u32 %v899, 2147483648
  %v902 = vxor.u32 %v900, 2147483648
  %v903 = vmul.f32 %v901, 1.442695
  %v904 = vpow.pop %v903
  %v905 = vmul.f32 %v902, 1.442695
  %v906 = vpow.pop %v905
  %v907 = vadd.f32 %v904, 1.0
  %v908 = vadd.f32 %v906, 1.0
  %v909 = vrcp.pop %v907
  %v910 = vmul.f32 1.0, %v909
  %v911 = vrcp.pop %v908
  %v912 = vmul.f32 1.0, %v911
  %v913 = vtanh.pop %v899
  %v914 = vtanh.pop %v900
  %v917 = vrot.slane %v713, 7
  %v918 = vrot.slane %v714, 7
  %v921 = vmul.f32 %v910, %v917
  %v922 = vmul.f32 %v912, %v918
  %925 = vrot.lane.b32.xlu0 %v913, 64
  %v926 = vpop.permute.xlu0 %925
  %927 = vrot.lane.b32.xlu0 %v914, 64
  %v928 = vpop.permute.xlu0 %927
  %v931 = vmul.f32 %v910, %v926
  %v932 = vmul.f32 %v912, %v928
  %935 = vrot.lane.b32.xlu0 %v931, 32
  %v936 = vpop.permute.xlu0 %935
  %937 = vrot.lane.b32.xlu0 %v932, 32
  %v938 = vpop.permute.xlu0 %937
  %v941 = vadd.f32 %v921, %v936
  %v942 = vadd.f32 %v922, %v938
  %v943 = vtanh.pop %v941
  %v944 = vtanh.pop %v942
  %947 = vrot.lane.b32.xlu0 %v943, 64
  %v948 = vpop.permute.xlu0 %947
  %949 = vrot.lane.b32.xlu0 %v944, 64
  %v950 = vpop.permute.xlu0 %949
  %v953 = vmul.f32 %v910, %v948
  %v954 = vmul.f32 %v912, %v950
  %v955 = vpack.c.bf16 %v853, %v853
  %957 = vrot.lane.b32.xlu0 %v955, 32
  %v958 = vpop.permute.xlu0 %957
  %v960 = vsel %vm152, %v958, 0
  %962 = vmatprep.subr.bf16.mxu0 0
  %963 = vmatpush1.bf16.msra.mxu0 0
  %964 = vmatprep.subr.bf16.mxu0 0
  %965 = vmatpush1.bf16.msra.mxu0 0
  %966 = vmatprep.subr.bf16.mxu0 0
  %967 = vmatpush1.bf16.msra.mxu0 0
  %968 = vmatprep.subr.bf16.mxu0 0
  %969 = vmatpush1.bf16.msra.mxu0 0
  %970 = vmatprep.subr.bf16.mxu0 0
  %971 = vmatpush1.bf16.msra.mxu0 0
  %972 = vmatprep.subr.bf16.mxu0 0
  %973 = vmatpush1.bf16.msra.mxu0 0
  %974 = vmatprep.subr.bf16.mxu0 0
  %975 = vmatpush1.bf16.msra.mxu0 %v259
  %976 = vmatprep.subr.bf16.mxu0 0
  %977 = vmatpush1.bf16.msra.mxu0 %v258
  %978 = vmatprep.subr.bf16.mxu0 0
  %979 = vmatpush2.bf16.msra.mxu0 0
  %980 = vmatprep.subr.bf16.mxu0 0
  %981 = vmatpush2.bf16.msra.mxu0 0
  %982 = vmatprep.subr.bf16.mxu0 0
  %983 = vmatpush2.bf16.msra.mxu0 0
  %984 = vmatprep.subr.bf16.mxu0 0
  %985 = vmatpush2.bf16.msra.mxu0 0
  %986 = vmatprep.subr.bf16.mxu0 0
  %987 = vmatpush2.bf16.msra.mxu0 0
  %988 = vmatprep.subr.bf16.mxu0 0
  %989 = vmatpush2.bf16.msra.mxu0 0
  %990 = vmatprep.subr.bf16.mxu0 0
  %991 = vmatpush2.bf16.msra.mxu0 0
  %992 = vmatprep.subr.bf16.mxu0 0
  %993 = vmatpush2.bf16.msra.mxu0 0
  %994 = vmatprep.mubr.bf16.mxu0 0
  %995 = vmatmul.mubr.bf16.gmra.mxu0 %v960
  %v996 = vpop.f32.mrf.mxu0
  %v997 = vadd.f32 0.0, %v996
  %v998 = vpop.f32.mrf.mxu0
  %v999 = vpop.f32.mrf.mxu0
  %v1000 = vpop.f32.mrf.mxu0
  %1001 = vdwg.mxu0
  %v1002 = vpack.c.bf16 %v953, %v953
  %v1003 = vpack.c.bf16 %v954, %v954
  %v1006 = vunpack.c.l.b16 %v1002
  %v1007 = vunpack.c.l.b16 %v1003
  %v1008 = vrot.slane %v1006, 3
  %v1009 = vrot.slane %v1007, 2
  %v1010 = vsel %vm309, %v1009, %v1008
  %v1011 = vpack.c.b16 %v1010, %v1010
  %1012 = vrot.lane.b32.xlu0 %v1011, 32
  %v1013 = vpop.permute.xlu0 %1012
  %v1015 = vsel %vm152, %v1013, 0
  %1017 = vmatprep.subr.bf16.mxu0 0
  %1018 = vmatpush1.bf16.msra.mxu0 0
  %1019 = vmatprep.subr.bf16.mxu0 0
  %1020 = vmatpush1.bf16.msra.mxu0 0
  %1021 = vmatprep.subr.bf16.mxu0 0
  %1022 = vmatpush1.bf16.msra.mxu0 0
  %1023 = vmatprep.subr.bf16.mxu0 0
  %1024 = vmatpush1.bf16.msra.mxu0 0
  %1025 = vmatprep.subr.bf16.mxu0 0
  %1026 = vmatpush1.bf16.msra.mxu0 0
  %1027 = vmatprep.subr.bf16.mxu0 0
  %1028 = vmatpush1.bf16.msra.mxu0 0
  %1029 = vmatprep.subr.bf16.mxu0 0
  %1030 = vmatpush1.bf16.msra.mxu0 %v323
  %1031 = vmatprep.subr.bf16.mxu0 0
  %1032 = vmatpush1.bf16.msra.mxu0 %v322
  %1033 = vmatprep.subr.bf16.mxu0 0
  %1034 = vmatpush2.bf16.msra.mxu0 0
  %1035 = vmatprep.subr.bf16.mxu0 0
  %1036 = vmatpush2.bf16.msra.mxu0 0
  %1037 = vmatprep.subr.bf16.mxu0 0
  %1038 = vmatpush2.bf16.msra.mxu0 0
  %1039 = vmatprep.subr.bf16.mxu0 0
  %1040 = vmatpush2.bf16.msra.mxu0 0
  %1041 = vmatprep.subr.bf16.mxu0 0
  %1042 = vmatpush2.bf16.msra.mxu0 0
  %1043 = vmatprep.subr.bf16.mxu0 0
  %1044 = vmatpush2.bf16.msra.mxu0 0
  %1045 = vmatprep.subr.bf16.mxu0 0
  %1046 = vmatpush2.bf16.msra.mxu0 0
  %1047 = vmatprep.subr.bf16.mxu0 0
  %1048 = vmatpush2.bf16.msra.mxu0 0
  %1049 = vmatprep.mubr.bf16.mxu0 0
  %1050 = vmatmul.mubr.bf16.gmra.mxu0 %v1015
  %v1051 = vpop.f32.mrf.mxu0
  %v1052 = vadd.f32 %v997, %v1051
  %v1053 = vpop.f32.mrf.mxu0
  %v1054 = vpop.f32.mrf.mxu0
  %v1055 = vpop.f32.mrf.mxu0
  %1056 = vdwg.mxu0
  %v1057 = vadd.f32 %v1052, %v373
  %v1058 = vxor.u32 %v1057, 2147483648
  %v1059 = vmul.f32 %v1058, 1.442695
  %v1060 = vpow.pop %v1059
  %v1061 = vadd.f32 %v1060, 1.0
  %v1062 = vrcp.pop %v1061
  %v1063 = vmul.f32 1.0, %v1062
  %v1064 = vtanh.pop %v1057
  %v1065 = vmul.f32 %v1063, %v847
  %1067 = vrot.lane.b32.xlu0 %v1064, 64
  %v1068 = vpop.permute.xlu0 %1067
  %v1070 = vmul.f32 %v1063, %v1068
  %1072 = vrot.lane.b32.xlu0 %v1070, 32
  %v1073 = vpop.permute.xlu0 %1072
  %v1075 = vadd.f32 %v1065, %v1073
  %v1076 = vtanh.pop %v1075
  %1078 = vrot.lane.b32.xlu0 %v1076, 64
  %v1079 = vpop.permute.xlu0 %1078
  %v1081 = vmul.f32 %v1063, %v1079
  %1082 = vmatprep.subr.bf16.mxu0 0
  %1083 = vmatpush1.bf16.msra.mxu0 0
  %1084 = vmatprep.subr.bf16.mxu0 0
  %1085 = vmatpush1.bf16.msra.mxu0 0
  %1086 = vmatprep.subr.bf16.mxu0 0
  %1087 = vmatpush1.bf16.msra.mxu0 0
  %1088 = vmatprep.subr.bf16.mxu0 0
  %1089 = vmatpush1.bf16.msra.mxu0 0
  %1090 = vmatprep.subr.bf16.mxu0 0
  %1091 = vmatpush1.bf16.msra.mxu0 0
  %1092 = vmatprep.subr.bf16.mxu0 0
  %1093 = vmatpush1.bf16.msra.mxu0 0
  %1094 = vmatprep.subr.bf16.mxu0 0
  %1095 = vmatpush1.bf16.msra.mxu0 %v149
  %1096 = vmatprep.subr.bf16.mxu0 0
  %1097 = vmatpush1.bf16.msra.mxu0 %v148
  %1098 = vmatprep.subr.bf16.mxu0 0
  %1099 = vmatpush2.bf16.msra.mxu0 0
  %1100 = vmatprep.subr.bf16.mxu0 0
  %1101 = vmatpush2.bf16.msra.mxu0 0
  %1102 = vmatprep.subr.bf16.mxu0 0
  %1103 = vmatpush2.bf16.msra.mxu0 0
  %1104 = vmatprep.subr.bf16.mxu0 0
  %1105 = vmatpush2.bf16.msra.mxu0 0
  %1106 = vmatprep.subr.bf16.mxu0 0
  %1107 = vmatpush2.bf16.msra.mxu0 0
  %1108 = vmatprep.subr.bf16.mxu0 0
  %1109 = vmatpush2.bf16.msra.mxu0 0
  %1110 = vmatprep.subr.bf16.mxu0 0
  %1111 = vmatpush2.bf16.msra.mxu0 0
  %1112 = vmatprep.subr.bf16.mxu0 0
  %1113 = vmatpush2.bf16.msra.mxu0 0
  %1114 = vmatprep.mubr.bf16.mxu0 0
  %1115 = vmatmul.mubr.bf16.gmra.mxu0 %v1015
  %v1116 = vpop.f32.mrf.mxu0
  %v1117 = vadd.f32 0.0, %v1116
  %v1118 = vpop.f32.mrf.mxu0
  %v1119 = vpop.f32.mrf.mxu0
  %v1120 = vpop.f32.mrf.mxu0
  %1121 = vdwg.mxu0
  %v1123 = vrot.slane %v1117, 4
  %v1124 = vrot.slane %v1117, 5
  %v1127 = vadd.f32 %v117, %v1123
  %v1128 = vadd.f32 %v122, %v1124
  %v1129 = vxor.u32 %v1127, 2147483648
  %v1130 = vxor.u32 %v1128, 2147483648
  %v1131 = vmul.f32 %v1129, 1.442695
  %v1132 = vpow.pop %v1131
  %v1133 = vmul.f32 %v1130, 1.442695
  %v1134 = vpow.pop %v1133
  %v1135 = vadd.f32 %v1132, 1.0
  %v1136 = vadd.f32 %v1134, 1.0
  %v1137 = vrcp.pop %v1135
  %v1138 = vmul.f32 1.0, %v1137
  %v1139 = vrcp.pop %v1136
  %v1140 = vmul.f32 1.0, %v1139
  %v1141 = vtanh.pop %v1127
  %v1142 = vtanh.pop %v1128
  %v1145 = vrot.slane %v941, 7
  %v1146 = vrot.slane %v942, 7
  %v1149 = vmul.f32 %v1138, %v1145
  %v1150 = vmul.f32 %v1140, %v1146
  %1153 = vrot.lane.b32.xlu0 %v1141, 64
  %v1154 = vpop.permute.xlu0 %1153
  %1155 = vrot.lane.b32.xlu0 %v1142, 64
  %v1156 = vpop.permute.xlu0 %1155
  %v1159 = vmul.f32 %v1138, %v1154
  %v1160 = vmul.f32 %v1140, %v1156
  %1163 = vrot.lane.b32.xlu0 %v1159, 32
  %v1164 = vpop.permute.xlu0 %1163
  %1165 = vrot.lane.b32.xlu0 %v1160, 32
  %v1166 = vpop.permute.xlu0 %1165
  %v1169 = vadd.f32 %v1149, %v1164
  %v1170 = vadd.f32 %v1150, %v1166
  %v1171 = vtanh.pop %v1169
  %v1172 = vtanh.pop %v1170
  %1175 = vrot.lane.b32.xlu0 %v1171, 64
  %v1176 = vpop.permute.xlu0 %1175
  %1177 = vrot.lane.b32.xlu0 %v1172, 64
  %v1178 = vpop.permute.xlu0 %1177
  %v1181 = vmul.f32 %v1138, %v1176
  %v1182 = vmul.f32 %v1140, %v1178
  %v1183 = vpack.c.bf16 %v1081, %v1081
  %1185 = vrot.lane.b32.xlu0 %v1183, 32
  %v1186 = vpop.permute.xlu0 %1185
  %v1188 = vsel %vm152, %v1186, 0
  %1190 = vmatprep.subr.bf16.mxu0 0
  %1191 = vmatpush1.bf16.msra.mxu0 0
  %1192 = vmatprep.subr.bf16.mxu0 0
  %1193 = vmatpush1.bf16.msra.mxu0 0
  %1194 = vmatprep.subr.bf16.mxu0 0
  %1195 = vmatpush1.bf16.msra.mxu0 0
  %1196 = vmatprep.subr.bf16.mxu0 0
  %1197 = vmatpush1.bf16.msra.mxu0 0
  %1198 = vmatprep.subr.bf16.mxu0 0
  %1199 = vmatpush1.bf16.msra.mxu0 0
  %1200 = vmatprep.subr.bf16.mxu0 0
  %1201 = vmatpush1.bf16.msra.mxu0 0
  %1202 = vmatprep.subr.bf16.mxu0 0
  %1203 = vmatpush1.bf16.msra.mxu0 %v259
  %1204 = vmatprep.subr.bf16.mxu0 0
  %1205 = vmatpush1.bf16.msra.mxu0 %v258
  %1206 = vmatprep.subr.bf16.mxu0 0
  %1207 = vmatpush2.bf16.msra.mxu0 0
  %1208 = vmatprep.subr.bf16.mxu0 0
  %1209 = vmatpush2.bf16.msra.mxu0 0
  %1210 = vmatprep.subr.bf16.mxu0 0
  %1211 = vmatpush2.bf16.msra.mxu0 0
  %1212 = vmatprep.subr.bf16.mxu0 0
  %1213 = vmatpush2.bf16.msra.mxu0 0
  %1214 = vmatprep.subr.bf16.mxu0 0
  %1215 = vmatpush2.bf16.msra.mxu0 0
  %1216 = vmatprep.subr.bf16.mxu0 0
  %1217 = vmatpush2.bf16.msra.mxu0 0
  %1218 = vmatprep.subr.bf16.mxu0 0
  %1219 = vmatpush2.bf16.msra.mxu0 0
  %1220 = vmatprep.subr.bf16.mxu0 0
  %1221 = vmatpush2.bf16.msra.mxu0 0
  %1222 = vmatprep.mubr.bf16.mxu0 0
  %1223 = vmatmul.mubr.bf16.gmra.mxu0 %v1188
  %v1224 = vpop.f32.mrf.mxu0
  %v1225 = vadd.f32 0.0, %v1224
  %v1226 = vpop.f32.mrf.mxu0
  %v1227 = vpop.f32.mrf.mxu0
  %v1228 = vpop.f32.mrf.mxu0
  %1229 = vdwg.mxu0
  %v1230 = vpack.c.bf16 %v1181, %v1181
  %v1231 = vpack.c.bf16 %v1182, %v1182
  %v1234 = vunpack.c.l.b16 %v1230
  %v1235 = vunpack.c.l.b16 %v1231
  %v1236 = vrot.slane %v1234, 4
  %v1237 = vrot.slane %v1235, 3
  %v1238 = vsel %vm309, %v1237, %v1236
  %v1239 = vpack.c.b16 %v1238, %v1238
  %1240 = vrot.lane.b32.xlu0 %v1239, 32
  %v1241 = vpop.permute.xlu0 %1240
  %v1243 = vsel %vm152, %v1241, 0
  %1245 = vmatprep.subr.bf16.mxu0 0
  %1246 = vmatpush1.bf16.msra.mxu0 0
  %1247 = vmatprep.subr.bf16.mxu0 0
  %1248 = vmatpush1.bf16.msra.mxu0 0
  %1249 = vmatprep.subr.bf16.mxu0 0
  %1250 = vmatpush1.bf16.msra.mxu0 0
  %1251 = vmatprep.subr.bf16.mxu0 0
  %1252 = vmatpush1.bf16.msra.mxu0 0
  %1253 = vmatprep.subr.bf16.mxu0 0
  %1254 = vmatpush1.bf16.msra.mxu0 0
  %1255 = vmatprep.subr.bf16.mxu0 0
  %1256 = vmatpush1.bf16.msra.mxu0 0
  %1257 = vmatprep.subr.bf16.mxu0 0
  %1258 = vmatpush1.bf16.msra.mxu0 %v323
  %1259 = vmatprep.subr.bf16.mxu0 0
  %1260 = vmatpush1.bf16.msra.mxu0 %v322
  %1261 = vmatprep.subr.bf16.mxu0 0
  %1262 = vmatpush2.bf16.msra.mxu0 0
  %1263 = vmatprep.subr.bf16.mxu0 0
  %1264 = vmatpush2.bf16.msra.mxu0 0
  %1265 = vmatprep.subr.bf16.mxu0 0
  %1266 = vmatpush2.bf16.msra.mxu0 0
  %1267 = vmatprep.subr.bf16.mxu0 0
  %1268 = vmatpush2.bf16.msra.mxu0 0
  %1269 = vmatprep.subr.bf16.mxu0 0
  %1270 = vmatpush2.bf16.msra.mxu0 0
  %1271 = vmatprep.subr.bf16.mxu0 0
  %1272 = vmatpush2.bf16.msra.mxu0 0
  %1273 = vmatprep.subr.bf16.mxu0 0
  %1274 = vmatpush2.bf16.msra.mxu0 0
  %1275 = vmatprep.subr.bf16.mxu0 0
  %1276 = vmatpush2.bf16.msra.mxu0 0
  %1277 = vmatprep.mubr.bf16.mxu0 0
  %1278 = vmatmul.mubr.bf16.gmra.mxu0 %v1243
  %v1279 = vpop.f32.mrf.mxu0
  %v1280 = vadd.f32 %v1225, %v1279
  %v1281 = vpop.f32.mrf.mxu0
  %v1282 = vpop.f32.mrf.mxu0
  %v1283 = vpop.f32.mrf.mxu0
  %1284 = vdwg.mxu0
  %v1285 = vadd.f32 %v1280, %v373
  %v1286 = vxor.u32 %v1285, 2147483648
  %v1287 = vmul.f32 %v1286, 1.442695
  %v1288 = vpow.pop %v1287
  %v1289 = vadd.f32 %v1288, 1.0
  %v1290 = vrcp.pop %v1289
  %v1291 = vmul.f32 1.0, %v1290
  %v1292 = vtanh.pop %v1285
  %v1293 = vmul.f32 %v1291, %v1075
  %1295 = vrot.lane.b32.xlu0 %v1292, 64
  %v1296 = vpop.permute.xlu0 %1295
  %v1298 = vmul.f32 %v1291, %v1296
  %1300 = vrot.lane.b32.xlu0 %v1298, 32
  %v1301 = vpop.permute.xlu0 %1300
  %v1303 = vadd.f32 %v1293, %v1301
  %v1304 = vtanh.pop %v1303
  %1306 = vrot.lane.b32.xlu0 %v1304, 64
  %v1307 = vpop.permute.xlu0 %1306
  %v1309 = vmul.f32 %v1291, %v1307
  %1310 = vmatprep.subr.bf16.mxu0 0
  %1311 = vmatpush1.bf16.msra.mxu0 0
  %1312 = vmatprep.subr.bf16.mxu0 0
  %1313 = vmatpush1.bf16.msra.mxu0 0
  %1314 = vmatprep.subr.bf16.mxu0 0
  %1315 = vmatpush1.bf16.msra.mxu0 0
  %1316 = vmatprep.subr.bf16.mxu0 0
  %1317 = vmatpush1.bf16.msra.mxu0 0
  %1318 = vmatprep.subr.bf16.mxu0 0
  %1319 = vmatpush1.bf16.msra.mxu0 0
  %1320 = vmatprep.subr.bf16.mxu0 0
  %1321 = vmatpush1.bf16.msra.mxu0 0
  %1322 = vmatprep.subr.bf16.mxu0 0
  %1323 = vmatpush1.bf16.msra.mxu0 %v149
  %1324 = vmatprep.subr.bf16.mxu0 0
  %1325 = vmatpush1.bf16.msra.mxu0 %v148
  %1326 = vmatprep.subr.bf16.mxu0 0
  %1327 = vmatpush2.bf16.msra.mxu0 0
  %1328 = vmatprep.subr.bf16.mxu0 0
  %1329 = vmatpush2.bf16.msra.mxu0 0
  %1330 = vmatprep.subr.bf16.mxu0 0
  %1331 = vmatpush2.bf16.msra.mxu0 0
  %1332 = vmatprep.subr.bf16.mxu0 0
  %1333 = vmatpush2.bf16.msra.mxu0 0
  %1334 = vmatprep.subr.bf16.mxu0 0
  %1335 = vmatpush2.bf16.msra.mxu0 0
  %1336 = vmatprep.subr.bf16.mxu0 0
  %1337 = vmatpush2.bf16.msra.mxu0 0
  %1338 = vmatprep.subr.bf16.mxu0 0
  %1339 = vmatpush2.bf16.msra.mxu0 0
  %1340 = vmatprep.subr.bf16.mxu0 0
  %1341 = vmatpush2.bf16.msra.mxu0 0
  %1342 = vmatprep.mubr.bf16.mxu0 0
  %1343 = vmatmul.mubr.bf16.gmra.mxu0 %v1243
  %v1344 = vpop.f32.mrf.mxu0
  %v1345 = vadd.f32 0.0, %v1344
  %v1346 = vpop.f32.mrf.mxu0
  %v1347 = vpop.f32.mrf.mxu0
  %v1348 = vpop.f32.mrf.mxu0
  %1349 = vdwg.mxu0
  %v1351 = vrot.slane %v1345, 3
  %v1352 = vrot.slane %v1345, 4
  %v1355 = vadd.f32 %v117, %v1351
  %v1356 = vadd.f32 %v122, %v1352
  %v1357 = vxor.u32 %v1355, 2147483648
  %v1358 = vxor.u32 %v1356, 2147483648
  %v1359 = vmul.f32 %v1357, 1.442695
  %v1360 = vpow.pop %v1359
  %v1361 = vmul.f32 %v1358, 1.442695
  %v1362 = vpow.pop %v1361
  %v1363 = vadd.f32 %v1360, 1.0
  %v1364 = vadd.f32 %v1362, 1.0
  %v1365 = vrcp.pop %v1363
  %v1366 = vmul.f32 1.0, %v1365
  %v1367 = vrcp.pop %v1364
  %v1368 = vmul.f32 1.0, %v1367
  %v1369 = vtanh.pop %v1355
  %v1370 = vtanh.pop %v1356
  %v1373 = vrot.slane %v1169, 7
  %v1374 = vrot.slane %v1170, 7
  %v1377 = vmul.f32 %v1366, %v1373
  %v1378 = vmul.f32 %v1368, %v1374
  %1381 = vrot.lane.b32.xlu0 %v1369, 64
  %v1382 = vpop.permute.xlu0 %1381
  %1383 = vrot.lane.b32.xlu0 %v1370, 64
  %v1384 = vpop.permute.xlu0 %1383
  %v1387 = vmul.f32 %v1366, %v1382
  %v1388 = vmul.f32 %v1368, %v1384
  %1391 = vrot.lane.b32.xlu0 %v1387, 32
  %v1392 = vpop.permute.xlu0 %1391
  %1393 = vrot.lane.b32.xlu0 %v1388, 32
  %v1394 = vpop.permute.xlu0 %1393
  %v1397 = vadd.f32 %v1377, %v1392
  %v1398 = vadd.f32 %v1378, %v1394
  %v1399 = vtanh.pop %v1397
  %v1400 = vtanh.pop %v1398
  %1403 = vrot.lane.b32.xlu0 %v1399, 64
  %v1404 = vpop.permute.xlu0 %1403
  %1405 = vrot.lane.b32.xlu0 %v1400, 64
  %v1406 = vpop.permute.xlu0 %1405
  %v1409 = vmul.f32 %v1366, %v1404
  %v1410 = vmul.f32 %v1368, %v1406
  %v1411 = vpack.c.bf16 %v1309, %v1309
  %1413 = vrot.lane.b32.xlu0 %v1411, 32
  %v1414 = vpop.permute.xlu0 %1413
  %v1416 = vsel %vm152, %v1414, 0
  %1418 = vmatprep.subr.bf16.mxu0 0
  %1419 = vmatpush1.bf16.msra.mxu0 0
  %1420 = vmatprep.subr.bf16.mxu0 0
  %1421 = vmatpush1.bf16.msra.mxu0 0
  %1422 = vmatprep.subr.bf16.mxu0 0
  %1423 = vmatpush1.bf16.msra.mxu0 0
  %1424 = vmatprep.subr.bf16.mxu0 0
  %1425 = vmatpush1.bf16.msra.mxu0 0
  %1426 = vmatprep.subr.bf16.mxu0 0
  %1427 = vmatpush1.bf16.msra.mxu0 0
  %1428 = vmatprep.subr.bf16.mxu0 0
  %1429 = vmatpush1.bf16.msra.mxu0 0
  %1430 = vmatprep.subr.bf16.mxu0 0
  %1431 = vmatpush1.bf16.msra.mxu0 %v259
  %1432 = vmatprep.subr.bf16.mxu0 0
  %1433 = vmatpush1.bf16.msra.mxu0 %v258
  %1434 = vmatprep.subr.bf16.mxu0 0
  %1435 = vmatpush2.bf16.msra.mxu0 0
  %1436 = vmatprep.subr.bf16.mxu0 0
  %1437 = vmatpush2.bf16.msra.mxu0 0
  %1438 = vmatprep.subr.bf16.mxu0 0
  %1439 = vmatpush2.bf16.msra.mxu0 0
  %1440 = vmatprep.subr.bf16.mxu0 0
  %1441 = vmatpush2.bf16.msra.mxu0 0
  %1442 = vmatprep.subr.bf16.mxu0 0
  %1443 = vmatpush2.bf16.msra.mxu0 0
  %1444 = vmatprep.subr.bf16.mxu0 0
  %1445 = vmatpush2.bf16.msra.mxu0 0
  %1446 = vmatprep.subr.bf16.mxu0 0
  %1447 = vmatpush2.bf16.msra.mxu0 0
  %1448 = vmatprep.subr.bf16.mxu0 0
  %1449 = vmatpush2.bf16.msra.mxu0 0
  %1450 = vmatprep.mubr.bf16.mxu0 0
  %1451 = vmatmul.mubr.bf16.gmra.mxu0 %v1416
  %v1452 = vpop.f32.mrf.mxu0
  %v1453 = vadd.f32 0.0, %v1452
  %v1454 = vpop.f32.mrf.mxu0
  %v1455 = vpop.f32.mrf.mxu0
  %v1456 = vpop.f32.mrf.mxu0
  %1457 = vdwg.mxu0
  %v1458 = vpack.c.bf16 %v1409, %v1409
  %v1459 = vpack.c.bf16 %v1410, %v1410
  %v1462 = vunpack.c.l.b16 %v1458
  %v1463 = vunpack.c.l.b16 %v1459
  %v1464 = vrot.slane %v1462, 5
  %v1465 = vrot.slane %v1463, 4
  %v1466 = vsel %vm309, %v1465, %v1464
  %v1467 = vpack.c.b16 %v1466, %v1466
  %1468 = vrot.lane.b32.xlu0 %v1467, 32
  %v1469 = vpop.permute.xlu0 %1468
  %v1471 = vsel %vm152, %v1469, 0
  %1473 = vmatprep.subr.bf16.mxu0 0
  %1474 = vmatpush1.bf16.msra.mxu0 0
  %1475 = vmatprep.subr.bf16.mxu0 0
  %1476 = vmatpush1.bf16.msra.mxu0 0
  %1477 = vmatprep.subr.bf16.mxu0 0
  %1478 = vmatpush1.bf16.msra.mxu0 0
  %1479 = vmatprep.subr.bf16.mxu0 0
  %1480 = vmatpush1.bf16.msra.mxu0 0
  %1481 = vmatprep.subr.bf16.mxu0 0
  %1482 = vmatpush1.bf16.msra.mxu0 0
  %1483 = vmatprep.subr.bf16.mxu0 0
  %1484 = vmatpush1.bf16.msra.mxu0 0
  %1485 = vmatprep.subr.bf16.mxu0 0
  %1486 = vmatpush1.bf16.msra.mxu0 %v323
  %1487 = vmatprep.subr.bf16.mxu0 0
  %1488 = vmatpush1.bf16.msra.mxu0 %v322
  %1489 = vmatprep.subr.bf16.mxu0 0
  %1490 = vmatpush2.bf16.msra.mxu0 0
  %1491 = vmatprep.subr.bf16.mxu0 0
  %1492 = vmatpush2.bf16.msra.mxu0 0
  %1493 = vmatprep.subr.bf16.mxu0 0
  %1494 = vmatpush2.bf16.msra.mxu0 0
  %1495 = vmatprep.subr.bf16.mxu0 0
  %1496 = vmatpush2.bf16.msra.mxu0 0
  %1497 = vmatprep.subr.bf16.mxu0 0
  %1498 = vmatpush2.bf16.msra.mxu0 0
  %1499 = vmatprep.subr.bf16.mxu0 0
  %1500 = vmatpush2.bf16.msra.mxu0 0
  %1501 = vmatprep.subr.bf16.mxu0 0
  %1502 = vmatpush2.bf16.msra.mxu0 0
  %1503 = vmatprep.subr.bf16.mxu0 0
  %1504 = vmatpush2.bf16.msra.mxu0 0
  %1505 = vmatprep.mubr.bf16.mxu0 0
  %1506 = vmatmul.mubr.bf16.gmra.mxu0 %v1471
  %v1507 = vpop.f32.mrf.mxu0
  %v1508 = vadd.f32 %v1453, %v1507
  %v1509 = vpop.f32.mrf.mxu0
  %v1510 = vpop.f32.mrf.mxu0
  %v1511 = vpop.f32.mrf.mxu0
  %1512 = vdwg.mxu0
  %v1513 = vadd.f32 %v1508, %v373
  %v1514 = vxor.u32 %v1513, 2147483648
  %v1515 = vmul.f32 %v1514, 1.442695
  %v1516 = vpow.pop %v1515
  %v1517 = vadd.f32 %v1516, 1.0
  %v1518 = vrcp.pop %v1517
  %v1519 = vmul.f32 1.0, %v1518
  %v1520 = vtanh.pop %v1513
  %v1521 = vmul.f32 %v1519, %v1303
  %1523 = vrot.lane.b32.xlu0 %v1520, 64
  %v1524 = vpop.permute.xlu0 %1523
  %v1526 = vmul.f32 %v1519, %v1524
  %1528 = vrot.lane.b32.xlu0 %v1526, 32
  %v1529 = vpop.permute.xlu0 %1528
  %v1531 = vadd.f32 %v1521, %v1529
  %v1532 = vtanh.pop %v1531
  %1534 = vrot.lane.b32.xlu0 %v1532, 64
  %v1535 = vpop.permute.xlu0 %1534
  %v1537 = vmul.f32 %v1519, %v1535
  %1538 = vmatprep.subr.bf16.mxu0 0
  %1539 = vmatpush1.bf16.msra.mxu0 0
  %1540 = vmatprep.subr.bf16.mxu0 0
  %1541 = vmatpush1.bf16.msra.mxu0 0
  %1542 = vmatprep.subr.bf16.mxu0 0
  %1543 = vmatpush1.bf16.msra.mxu0 0
  %1544 = vmatprep.subr.bf16.mxu0 0
  %1545 = vmatpush1.bf16.msra.mxu0 0
  %1546 = vmatprep.subr.bf16.mxu0 0
  %1547 = vmatpush1.bf16.msra.mxu0 0
  %1548 = vmatprep.subr.bf16.mxu0 0
  %1549 = vmatpush1.bf16.msra.mxu0 0
  %1550 = vmatprep.subr.bf16.mxu0 0
  %1551 = vmatpush1.bf16.msra.mxu0 %v149
  %1552 = vmatprep.subr.bf16.mxu0 0
  %1553 = vmatpush1.bf16.msra.mxu0 %v148
  %1554 = vmatprep.subr.bf16.mxu0 0
  %1555 = vmatpush2.bf16.msra.mxu0 0
  %1556 = vmatprep.subr.bf16.mxu0 0
  %1557 = vmatpush2.bf16.msra.mxu0 0
  %1558 = vmatprep.subr.bf16.mxu0 0
  %1559 = vmatpush2.bf16.msra.mxu0 0
  %1560 = vmatprep.subr.bf16.mxu0 0
  %1561 = vmatpush2.bf16.msra.mxu0 0
  %1562 = vmatprep.subr.bf16.mxu0 0
  %1563 = vmatpush2.bf16.msra.mxu0 0
  %1564 = vmatprep.subr.bf16.mxu0 0
  %1565 = vmatpush2.bf16.msra.mxu0 0
  %1566 = vmatprep.subr.bf16.mxu0 0
  %1567 = vmatpush2.bf16.msra.mxu0 0
  %1568 = vmatprep.subr.bf16.mxu0 0
  %1569 = vmatpush2.bf16.msra.mxu0 0
  %1570 = vmatprep.mubr.bf16.mxu0 0
  %1571 = vmatmul.mubr.bf16.gmra.mxu0 %v1471
  %v1572 = vpop.f32.mrf.mxu0
  %v1573 = vadd.f32 0.0, %v1572
  %v1574 = vpop.f32.mrf.mxu0
  %v1575 = vpop.f32.mrf.mxu0
  %v1576 = vpop.f32.mrf.mxu0
  %1577 = vdwg.mxu0
  %v1579 = vrot.slane %v1573, 2
  %v1580 = vrot.slane %v1573, 3
  %v1583 = vadd.f32 %v117, %v1579
  %v1584 = vadd.f32 %v122, %v1580
  %v1585 = vxor.u32 %v1583, 2147483648
  %v1586 = vxor.u32 %v1584, 2147483648
  %v1587 = vmul.f32 %v1585, 1.442695
  %v1588 = vpow.pop %v1587
  %v1589 = vmul.f32 %v1586, 1.442695
  %v1590 = vpow.pop %v1589
  %v1591 = vadd.f32 %v1588, 1.0
  %v1592 = vadd.f32 %v1590, 1.0
  %v1593 = vrcp.pop %v1591
  %v1594 = vmul.f32 1.0, %v1593
  %v1595 = vrcp.pop %v1592
  %v1596 = vmul.f32 1.0, %v1595
  %v1597 = vtanh.pop %v1583
  %v1598 = vtanh.pop %v1584
  %v1601 = vrot.slane %v1397, 7
  %v1602 = vrot.slane %v1398, 7
  %v1605 = vmul.f32 %v1594, %v1601
  %v1606 = vmul.f32 %v1596, %v1602
  %1609 = vrot.lane.b32.xlu0 %v1597, 64
  %v1610 = vpop.permute.xlu0 %1609
  %1611 = vrot.lane.b32.xlu0 %v1598, 64
  %v1612 = vpop.permute.xlu0 %1611
  %v1615 = vmul.f32 %v1594, %v1610
  %v1616 = vmul.f32 %v1596, %v1612
  %1619 = vrot.lane.b32.xlu0 %v1615, 32
  %v1620 = vpop.permute.xlu0 %1619
  %1621 = vrot.lane.b32.xlu0 %v1616, 32
  %v1622 = vpop.permute.xlu0 %1621
  %v1625 = vadd.f32 %v1605, %v1620
  %v1626 = vadd.f32 %v1606, %v1622
  %v1627 = vtanh.pop %v1625
  %v1628 = vtanh.pop %v1626
  %1631 = vrot.lane.b32.xlu0 %v1627, 64
  %v1632 = vpop.permute.xlu0 %1631
  %1633 = vrot.lane.b32.xlu0 %v1628, 64
  %v1634 = vpop.permute.xlu0 %1633
  %v1637 = vmul.f32 %v1594, %v1632
  %v1638 = vmul.f32 %v1596, %v1634
  %v1639 = vpack.c.bf16 %v1537, %v1537
  %1641 = vrot.lane.b32.xlu0 %v1639, 32
  %v1642 = vpop.permute.xlu0 %1641
  %v1644 = vsel %vm152, %v1642, 0
  %1646 = vmatprep.subr.bf16.mxu0 0
  %1647 = vmatpush1.bf16.msra.mxu0 0
  %1648 = vmatprep.subr.bf16.mxu0 0
  %1649 = vmatpush1.bf16.msra.mxu0 0
  %1650 = vmatprep.subr.bf16.mxu0 0
  %1651 = vmatpush1.bf16.msra.mxu0 0
  %1652 = vmatprep.subr.bf16.mxu0 0
  %1653 = vmatpush1.bf16.msra.mxu0 0
  %1654 = vmatprep.subr.bf16.mxu0 0
  %1655 = vmatpush1.bf16.msra.mxu0 0
  %1656 = vmatprep.subr.bf16.mxu0 0
  %1657 = vmatpush1.bf16.msra.mxu0 0
  %1658 = vmatprep.subr.bf16.mxu0 0
  %1659 = vmatpush1.bf16.msra.mxu0 %v259
  %1660 = vmatprep.subr.bf16.mxu0 0
  %1661 = vmatpush1.bf16.msra.mxu0 %v258
  %1662 = vmatprep.subr.bf16.mxu0 0
  %1663 = vmatpush2.bf16.msra.mxu0 0
  %1664 = vmatprep.subr.bf16.mxu0 0
  %1665 = vmatpush2.bf16.msra.mxu0 0
  %1666 = vmatprep.subr.bf16.mxu0 0
  %1667 = vmatpush2.bf16.msra.mxu0 0
  %1668 = vmatprep.subr.bf16.mxu0 0
  %1669 = vmatpush2.bf16.msra.mxu0 0
  %1670 = vmatprep.subr.bf16.mxu0 0
  %1671 = vmatpush2.bf16.msra.mxu0 0
  %1672 = vmatprep.subr.bf16.mxu0 0
  %1673 = vmatpush2.bf16.msra.mxu0 0
  %1674 = vmatprep.subr.bf16.mxu0 0
  %1675 = vmatpush2.bf16.msra.mxu0 0
  %1676 = vmatprep.subr.bf16.mxu0 0
  %1677 = vmatpush2.bf16.msra.mxu0 0
  %1678 = vmatprep.mubr.bf16.mxu0 0
  %1679 = vmatmul.mubr.bf16.gmra.mxu0 %v1644
  %v1680 = vpop.f32.mrf.mxu0
  %v1681 = vadd.f32 0.0, %v1680
  %v1682 = vpop.f32.mrf.mxu0
  %v1683 = vpop.f32.mrf.mxu0
  %v1684 = vpop.f32.mrf.mxu0
  %1685 = vdwg.mxu0
  %v1686 = vpack.c.bf16 %v1637, %v1637
  %v1687 = vpack.c.bf16 %v1638, %v1638
  %v1690 = vunpack.c.l.b16 %v1686
  %v1691 = vunpack.c.l.b16 %v1687
  %v1692 = vrot.slane %v1690, 6
  %v1693 = vrot.slane %v1691, 5
  %v1694 = vsel %vm309, %v1693, %v1692
  %v1695 = vpack.c.b16 %v1694, %v1694
  %1696 = vrot.lane.b32.xlu0 %v1695, 32
  %v1697 = vpop.permute.xlu0 %1696
  %v1699 = vsel %vm152, %v1697, 0
  %1701 = vmatprep.subr.bf16.mxu0 0
  %1702 = vmatpush1.bf16.msra.mxu0 0
  %1703 = vmatprep.subr.bf16.mxu0 0
  %1704 = vmatpush1.bf16.msra.mxu0 0
  %1705 = vmatprep.subr.bf16.mxu0 0
  %1706 = vmatpush1.bf16.msra.mxu0 0
  %1707 = vmatprep.subr.bf16.mxu0 0
  %1708 = vmatpush1.bf16.msra.mxu0 0
  %1709 = vmatprep.subr.bf16.mxu0 0
  %1710 = vmatpush1.bf16.msra.mxu0 0
  %1711 = vmatprep.subr.bf16.mxu0 0
  %1712 = vmatpush1.bf16.msra.mxu0 0
  %1713 = vmatprep.subr.bf16.mxu0 0
  %1714 = vmatpush1.bf16.msra.mxu0 %v323
  %1715 = vmatprep.subr.bf16.mxu0 0
  %1716 = vmatpush1.bf16.msra.mxu0 %v322
  %1717 = vmatprep.subr.bf16.mxu0 0
  %1718 = vmatpush2.bf16.msra.mxu0 0
  %1719 = vmatprep.subr.bf16.mxu0 0
  %1720 = vmatpush2.bf16.msra.mxu0 0
  %1721 = vmatprep.subr.bf16.mxu0 0
  %1722 = vmatpush2.bf16.msra.mxu0 0
  %1723 = vmatprep.subr.bf16.mxu0 0
  %1724 = vmatpush2.bf16.msra.mxu0 0
  %1725 = vmatprep.subr.bf16.mxu0 0
  %1726 = vmatpush2.bf16.msra.mxu0 0
  %1727 = vmatprep.subr.bf16.mxu0 0
  %1728 = vmatpush2.bf16.msra.mxu0 0
  %1729 = vmatprep.subr.bf16.mxu0 0
  %1730 = vmatpush2.bf16.msra.mxu0 0
  %1731 = vmatprep.subr.bf16.mxu0 0
  %1732 = vmatpush2.bf16.msra.mxu0 0
  %1733 = vmatprep.mubr.bf16.mxu0 0
  %1734 = vmatmul.mubr.bf16.gmra.mxu0 %v1699
  %v1735 = vpop.f32.mrf.mxu0
  %v1736 = vadd.f32 %v1681, %v1735
  %v1737 = vpop.f32.mrf.mxu0
  %v1738 = vpop.f32.mrf.mxu0
  %v1739 = vpop.f32.mrf.mxu0
  %1740 = vdwg.mxu0
  %v1741 = vadd.f32 %v1736, %v373
  %v1742 = vxor.u32 %v1741, 2147483648
  %v1743 = vmul.f32 %v1742, 1.442695
  %v1744 = vpow.pop %v1743
  %v1745 = vadd.f32 %v1744, 1.0
  %v1746 = vrcp.pop %v1745
  %v1747 = vmul.f32 1.0, %v1746
  %v1748 = vtanh.pop %v1741
  %v1749 = vmul.f32 %v1747, %v1531
  %1751 = vrot.lane.b32.xlu0 %v1748, 64
  %v1752 = vpop.permute.xlu0 %1751
  %v1754 = vmul.f32 %v1747, %v1752
  %1756 = vrot.lane.b32.xlu0 %v1754, 32
  %v1757 = vpop.permute.xlu0 %1756
  %v1759 = vadd.f32 %v1749, %v1757
  %v1760 = vtanh.pop %v1759
  %1762 = vrot.lane.b32.xlu0 %v1760, 64
  %v1763 = vpop.permute.xlu0 %1762
  %v1765 = vmul.f32 %v1747, %v1763
  %1766 = vmatprep.subr.bf16.mxu0 0
  %1767 = vmatpush1.bf16.msra.mxu0 0
  %1768 = vmatprep.subr.bf16.mxu0 0
  %1769 = vmatpush1.bf16.msra.mxu0 0
  %1770 = vmatprep.subr.bf16.mxu0 0
  %1771 = vmatpush1.bf16.msra.mxu0 0
  %1772 = vmatprep.subr.bf16.mxu0 0
  %1773 = vmatpush1.bf16.msra.mxu0 0
  %1774 = vmatprep.subr.bf16.mxu0 0
  %1775 = vmatpush1.bf16.msra.mxu0 0
  %1776 = vmatprep.subr.bf16.mxu0 0
  %1777 = vmatpush1.bf16.msra.mxu0 0
  %1778 = vmatprep.subr.bf16.mxu0 0
  %1779 = vmatpush1.bf16.msra.mxu0 %v149
  %1780 = vmatprep.subr.bf16.mxu0 0
  %1781 = vmatpush1.bf16.msra.mxu0 %v148
  %1782 = vmatprep.subr.bf16.mxu0 0
  %1783 = vmatpush2.bf16.msra.mxu0 0
  %1784 = vmatprep.subr.bf16.mxu0 0
  %1785 = vmatpush2.bf16.msra.mxu0 0
  %1786 = vmatprep.subr.bf16.mxu0 0
  %1787 = vmatpush2.bf16.msra.mxu0 0
  %1788 = vmatprep.subr.bf16.mxu0 0
  %1789 = vmatpush2.bf16.msra.mxu0 0
  %1790 = vmatprep.subr.bf16.mxu0 0
  %1791 = vmatpush2.bf16.msra.mxu0 0
  %1792 = vmatprep.subr.bf16.mxu0 0
  %1793 = vmatpush2.bf16.msra.mxu0 0
  %1794 = vmatprep.subr.bf16.mxu0 0
  %1795 = vmatpush2.bf16.msra.mxu0 0
  %1796 = vmatprep.subr.bf16.mxu0 0
  %1797 = vmatpush2.bf16.msra.mxu0 0
  %1798 = vmatprep.mubr.bf16.mxu0 0
  %1799 = vmatmul.mubr.bf16.gmra.mxu0 %v1699
  %v1800 = vpop.f32.mrf.mxu0
  %v1801 = vadd.f32 0.0, %v1800
  %v1802 = vpop.f32.mrf.mxu0
  %v1803 = vpop.f32.mrf.mxu0
  %v1804 = vpop.f32.mrf.mxu0
  %1805 = vdwg.mxu0
  %v1807 = vrot.slane %v1801, 1
  %v1808 = vrot.slane %v1801, 2
  %v1811 = vadd.f32 %v117, %v1807
  %v1812 = vadd.f32 %v122, %v1808
  %v1813 = vxor.u32 %v1811, 2147483648
  %v1814 = vxor.u32 %v1812, 2147483648
  %v1815 = vmul.f32 %v1813, 1.442695
  %v1816 = vpow.pop %v1815
  %v1817 = vmul.f32 %v1814, 1.442695
  %v1818 = vpow.pop %v1817
  %v1819 = vadd.f32 %v1816, 1.0
  %v1820 = vadd.f32 %v1818, 1.0
  %v1821 = vrcp.pop %v1819
  %v1822 = vmul.f32 1.0, %v1821
  %v1823 = vrcp.pop %v1820
  %v1824 = vmul.f32 1.0, %v1823
  %v1825 = vtanh.pop %v1811
  %v1826 = vtanh.pop %v1812
  %v1829 = vrot.slane %v1625, 7
  %v1830 = vrot.slane %v1626, 7
  %v1833 = vmul.f32 %v1822, %v1829
  %v1834 = vmul.f32 %v1824, %v1830
  %1837 = vrot.lane.b32.xlu0 %v1825, 64
  %v1838 = vpop.permute.xlu0 %1837
  %1839 = vrot.lane.b32.xlu0 %v1826, 64
  %v1840 = vpop.permute.xlu0 %1839
  %v1843 = vmul.f32 %v1822, %v1838
  %v1844 = vmul.f32 %v1824, %v1840
  %1847 = vrot.lane.b32.xlu0 %v1843, 32
  %v1848 = vpop.permute.xlu0 %1847
  %1849 = vrot.lane.b32.xlu0 %v1844, 32
  %v1850 = vpop.permute.xlu0 %1849
  %v1853 = vadd.f32 %v1833, %v1848
  %v1854 = vadd.f32 %v1834, %v1850
  %v1855 = vtanh.pop %v1853
  %v1856 = vtanh.pop %v1854
  %1859 = vrot.lane.b32.xlu0 %v1855, 64
  %v1860 = vpop.permute.xlu0 %1859
  %1861 = vrot.lane.b32.xlu0 %v1856, 64
  %v1862 = vpop.permute.xlu0 %1861
  %v1865 = vmul.f32 %v1822, %v1860
  %v1866 = vmul.f32 %v1824, %v1862
  %v1867 = vpack.c.bf16 %v1765, %v1765
  %1869 = vrot.lane.b32.xlu0 %v1867, 32
  %v1870 = vpop.permute.xlu0 %1869
  %v1872 = vsel %vm152, %v1870, 0
  %1874 = vmatprep.subr.bf16.mxu0 0
  %1875 = vmatpush1.bf16.msra.mxu0 0
  %1876 = vmatprep.subr.bf16.mxu0 0
  %1877 = vmatpush1.bf16.msra.mxu0 0
  %1878 = vmatprep.subr.bf16.mxu0 0
  %1879 = vmatpush1.bf16.msra.mxu0 0
  %1880 = vmatprep.subr.bf16.mxu0 0
  %1881 = vmatpush1.bf16.msra.mxu0 0
  %1882 = vmatprep.subr.bf16.mxu0 0
  %1883 = vmatpush1.bf16.msra.mxu0 0
  %1884 = vmatprep.subr.bf16.mxu0 0
  %1885 = vmatpush1.bf16.msra.mxu0 0
  %1886 = vmatprep.subr.bf16.mxu0 0
  %1887 = vmatpush1.bf16.msra.mxu0 %v259
  %1888 = vmatprep.subr.bf16.mxu0 0
  %1889 = vmatpush1.bf16.msra.mxu0 %v258
  %1890 = vmatprep.subr.bf16.mxu0 0
  %1891 = vmatpush2.bf16.msra.mxu0 0
  %1892 = vmatprep.subr.bf16.mxu0 0
  %1893 = vmatpush2.bf16.msra.mxu0 0
  %1894 = vmatprep.subr.bf16.mxu0 0
  %1895 = vmatpush2.bf16.msra.mxu0 0
  %1896 = vmatprep.subr.bf16.mxu0 0
  %1897 = vmatpush2.bf16.msra.mxu0 0
  %1898 = vmatprep.subr.bf16.mxu0 0
  %1899 = vmatpush2.bf16.msra.mxu0 0
  %1900 = vmatprep.subr.bf16.mxu0 0
  %1901 = vmatpush2.bf16.msra.mxu0 0
  %1902 = vmatprep.subr.bf16.mxu0 0
  %1903 = vmatpush2.bf16.msra.mxu0 0
  %1904 = vmatprep.subr.bf16.mxu0 0
  %1905 = vmatpush2.bf16.msra.mxu0 0
  %1906 = vmatprep.mubr.bf16.mxu0 0
  %1907 = vmatmul.mubr.bf16.gmra.mxu0 %v1872
  %v1908 = vpop.f32.mrf.mxu0
  %v1909 = vadd.f32 0.0, %v1908
  %v1910 = vpop.f32.mrf.mxu0
  %v1911 = vpop.f32.mrf.mxu0
  %v1912 = vpop.f32.mrf.mxu0
  %1913 = vdwg.mxu0
  %v1914 = vpack.c.bf16 %v1865, %v1865
  %v1915 = vpack.c.bf16 %v1866, %v1866
  %v1918 = vunpack.c.l.b16 %v1914
  %v1919 = vunpack.c.l.b16 %v1915
  %v1920 = vrot.slane %v1918, 7
  %v1921 = vrot.slane %v1919, 6
  %v1922 = vsel %vm309, %v1921, %v1920
  %v1923 = vpack.c.b16 %v1922, %v1922
  %1924 = vrot.lane.b32.xlu0 %v1923, 32
  %v1925 = vpop.permute.xlu0 %1924
  %v1927 = vsel %vm152, %v1925, 0
  %1929 = vmatprep.subr.bf16.mxu0 0
  %1930 = vmatpush1.bf16.msra.mxu0 0
  %1931 = vmatprep.subr.bf16.mxu0 0
  %1932 = vmatpush1.bf16.msra.mxu0 0
  %1933 = vmatprep.subr.bf16.mxu0 0
  %1934 = vmatpush1.bf16.msra.mxu0 0
  %1935 = vmatprep.subr.bf16.mxu0 0
  %1936 = vmatpush1.bf16.msra.mxu0 0
  %1937 = vmatprep.subr.bf16.mxu0 0
  %1938 = vmatpush1.bf16.msra.mxu0 0
  %1939 = vmatprep.subr.bf16.mxu0 0
  %1940 = vmatpush1.bf16.msra.mxu0 0
  %1941 = vmatprep.subr.bf16.mxu0 0
  %1942 = vmatpush1.bf16.msra.mxu0 %v323
  %1943 = vmatprep.subr.bf16.mxu0 0
  %1944 = vmatpush1.bf16.msra.mxu0 %v322
  %1945 = vmatprep.subr.bf16.mxu0 0
  %1946 = vmatpush2.bf16.msra.mxu0 0
  %1947 = vmatprep.subr.bf16.mxu0 0
  %1948 = vmatpush2.bf16.msra.mxu0 0
  %1949 = vmatprep.subr.bf16.mxu0 0
  %1950 = vmatpush2.bf16.msra.mxu0 0
  %1951 = vmatprep.subr.bf16.mxu0 0
  %1952 = vmatpush2.bf16.msra.mxu0 0
  %1953 = vmatprep.subr.bf16.mxu0 0
  %1954 = vmatpush2.bf16.msra.mxu0 0
  %1955 = vmatprep.subr.bf16.mxu0 0
  %1956 = vmatpush2.bf16.msra.mxu0 0
  %1957 = vmatprep.subr.bf16.mxu0 0
  %1958 = vmatpush2.bf16.msra.mxu0 0
  %1959 = vmatprep.subr.bf16.mxu0 0
  %1960 = vmatpush2.bf16.msra.mxu0 0
  %1961 = vmatprep.mubr.bf16.mxu0 0
  %1962 = vmatmul.mubr.bf16.gmra.mxu0 %v1927
  %v1963 = vpop.f32.mrf.mxu0
  %v1964 = vadd.f32 %v1909, %v1963
  %v1965 = vpop.f32.mrf.mxu0
  %v1966 = vpop.f32.mrf.mxu0
  %v1967 = vpop.f32.mrf.mxu0
  %1968 = vdwg.mxu0
  %v1969 = vadd.f32 %v1964, %v373
  %v1970 = vxor.u32 %v1969, 2147483648
  %v1971 = vmul.f32 %v1970, 1.442695
  %v1972 = vpow.pop %v1971
  %v1973 = vadd.f32 %v1972, 1.0
  %v1974 = vrcp.pop %v1973
  %v1975 = vmul.f32 1.0, %v1974
  %v1976 = vtanh.pop %v1969
  %v1977 = vmul.f32 %v1975, %v1759
  %1979 = vrot.lane.b32.xlu0 %v1976, 64
  %v1980 = vpop.permute.xlu0 %1979
  %v1982 = vmul.f32 %v1975, %v1980
  %1984 = vrot.lane.b32.xlu0 %v1982, 32
  %v1985 = vpop.permute.xlu0 %1984
  %v1987 = vadd.f32 %v1977, %v1985
  %v1988 = vtanh.pop %v1987
  %1990 = vrot.lane.b32.xlu0 %v1988, 64
  %v1991 = vpop.permute.xlu0 %1990
  %v1993 = vmul.f32 %v1975, %v1991
  %v1994 = vld [vmem:[%s5] sm:$0x1]
  %v1996 = vlaneseq
  %v1997 = vshrl.u32 %v1996, 7
  %v1998 = vsub.s32 0, %v1997
  %v1999 = vrot.slane %v1994, %v1998
  %2000 = vrot.lane.b32.xlu0 %v1999, 96
  %v2001 = vpop.permute.xlu0 %2000
  %v2003 = vmul.f32 %v1993, %v2001
  %2005 = vrot.lane.b32.xlu0 %v2003, 32
  %v2006 = vpop.permute.xlu0 %2005
  %vm2008 = vcmask 254976
  %v2009 = vsel %vm2008, %v2006, 0.0
  %2010 = vadd.xlane.f32.xlu0 %v2009
  %v2011 = vpop.xlane.xlu0 %2010
  %v2012 = vld [vmem:[#allocation2] sm:$0x1]
  %v2014 = vlaneseq
  %v2015 = vshrl.u32 %v2014, 7
  %v2016 = vsub.s32 0, %v2015
  %v2017 = vrot.slane %v2012, %v2016
  %v2019 = vadd.f32 %v2011, %v2017
  %vm2020 = vcmask 1024
  %2021 = vst.msk [vmem:[%s7] sm:$0x3] %vm2020, %v2019
  // Predicated region
  $region30: #{temperature_lstm_forward.1} parent=0 // pred_check
    _
  $region31: #{temperature_lstm_forward.1} parent=0 // pred_check_branch
    %2023 = sbr.rel (0) target = $region33
  $region32: #{temperature_lstm_forward.1} parent=0 // pred_region
    _
  $region33: #{temperature_lstm_forward.1} parent=0 // pred_fallthru
    _
  // Predicated region
  $region34: #{temperature_lstm_forward.1} parent=0 // pred_check
    _
  $region35: #{temperature_lstm_forward.1} parent=0 // pred_check_branch
    %2025 = sbr.rel (0) target = $region37
  $region36: #{temperature_lstm_forward.1} parent=0 // pred_region
    _
  $region37: #{temperature_lstm_forward.1} parent=0 // pred_fallthru
    _

</llo_original>
